<compile_context>
chip_gen: v5e
topology: v5e:2x2
jax: 0.10.0
libtpu: 0.0.40
codegen_flags: <defaults>
</compile_context>

<pallas_src>
import numpy as np
import jax
import jax.numpy as jnp
from jax import lax
from jax.experimental import pallas as pl
from jax.experimental.pallas import tpu as pltpu

_MiB = 1024 * 1024


def _vmem_budget_bytes():
    """Generation-aware VMEM budget: ~100 MiB on 128-MiB chips (v5e/v6e),
    ~51 MiB on v7x (64 MiB per TC).  Conservative fallback if the query fails."""
    try:
        cap = int(pltpu.get_tpu_info().vmem_capacity_bytes)
    except Exception:
        cap = 64 * _MiB
    return min(100 * _MiB, int(cap * 0.8))


def _cost(flops, transcendentals, bytes_accessed):
    try:
        return pl.CostEstimate(flops=int(flops), transcendentals=int(transcendentals),
                               bytes_accessed=int(bytes_accessed))
    except Exception:
        return None


# ----------------------------------------------------------------------------
# GELU (exact-erf flavour, torch.nn.GELU default)
# ----------------------------------------------------------------------------
def _gelu_erf(x):
    # erf via A&S 7.1.26; the approx reciprocal/EUP exp add ~1e-3 abs error on
    # top of the 1.5e-7 polynomial bound -- well inside the bf16 pipeline noise.
    a1, a2, a3, a4, a5 = 0.254829592, -0.284496736, 1.421413741, -1.453152027, 1.061405429
    p = 0.3275911
    z = x * 0.7071067811865476
    az = jnp.abs(z)
    t = pl.reciprocal(1.0 + p * az, approx=True)          # EUP slot, not VALU divide
    poly = ((((a5 * t + a4) * t + a3) * t + a2) * t + a1) * t
    erf_abs = 1.0 - poly * jnp.exp(-az * az)               # exp -> EUP slot
    erf = jnp.where(z >= 0.0, erf_abs, -erf_abs)
    return 0.5 * x * (1.0 + erf)


# ----------------------------------------------------------------------------
# Kernel 1: fused [deconv(k=2,s=2) as 4 matmuls] + GELU + [1x1 conv matmul].
# One grid step handles a tile of tm tokens; each sub-pixel is handled
# end-to-end to keep the live f32 intermediate at (tm, C).
# ----------------------------------------------------------------------------
def _head_kernel(x_ref, w1_ref, b1_ref, w2_ref, b2_ref, o_ref):
    # x_ref : (tm, C)      bf16 tokens
    # w1_ref: (4, C, C)    bf16 deconv weights, sub-pixel p = dy*2+dx leading
    # b1_ref: (4, 1, C)    f32  deconv bias
    # w2_ref: (C, Kp)      bf16 1x1-conv weight (transposed, maybe lane-padded)
    # b2_ref: (1, Kp)      f32  1x1-conv bias
    # o_ref : (tm, 4*Kp)   bf16, column index = p*Kp + k  (lane-dense)
    Kp = w2_ref.shape[1]
    x = x_ref[...]
    w2 = w2_ref[...]
    b2 = b2_ref[...]
    aligned = (Kp % 128 == 0)

    ys = []
    for sp in range(4):                                    # static unroll (4)
        h = jnp.dot(x, w1_ref[sp], preferred_element_type=jnp.float32)   # (tm, C)
        h = _gelu_erf(h + b1_ref[sp]).astype(jnp.bfloat16)
        y = jnp.dot(h, w2, preferred_element_type=jnp.float32) + b2      # (tm, Kp)
        if aligned:
            o_ref[:, sp * Kp:(sp + 1) * Kp] = y.astype(o_ref.dtype)      # unmasked vst
        else:
            ys.append(y)
    if not aligned:
        o_ref[...] = jnp.concatenate(ys, axis=-1).astype(o_ref.dtype)    # one packed write


# ----------------------------------------------------------------------------
# Kernel 2: bilinear resize as two matmuls per plane, P planes per grid step.
# Planes are in the BLOCKED layout (rows = dy*H+i, cols = dx*W+j); Ah/AwT have
# their columns permuted accordingly.  fori_loop bounds per-plane live ranges.
# ----------------------------------------------------------------------------
def _resize_kernel(ah_ref, awt_ref, x_ref, o_ref):
    # ah_ref : (outH, 2H)       bf16 row-interp matrix (blocked columns)
    # awt_ref: (2W, outW)       bf16 col-interp matrix, transposed (blocked rows)
    # x_ref  : (P, 2H, 2W)      bf16 planes (blocked layout)
    # o_ref  : (P, outH, outW)  out dtype
    ah = ah_ref[...]
    awt = awt_ref[...]
    P = x_ref.shape[0]

    def body(p, carry):
        t = jnp.dot(ah, x_ref[p], preferred_element_type=jnp.float32)      # (outH, 2W)
        o_ref[p] = jnp.dot(t.astype(jnp.bfloat16), awt,
                           preferred_element_type=jnp.float32).astype(o_ref.dtype)
        return carry

    lax.fori_loop(0, P, body, 0, unroll=2)


# ----------------------------------------------------------------------------
# Bilinear interpolation matrices (align_corners=False, PyTorch semantics)
# ----------------------------------------------------------------------------
def _bilinear_matrix(in_size, out_size):
    """Row o holds the align_corners=False bilinear weights over input pixels."""
    scale = in_size / out_size
    o = np.arange(out_size, dtype=np.float64)
    s = (o + 0.5) * scale - 0.5
    s = np.maximum(s, 0.0)                       # PyTorch clamps negative src idx
    i0 = np.minimum(np.floor(s).astype(np.int64), in_size - 1)
    i1 = np.minimum(i0 + 1, in_size - 1)
    lam = s - i0
    A = np.zeros((out_size, in_size), dtype=np.float32)
    A[np.arange(out_size), i0] += (1.0 - lam).astype(np.float32)
    A[np.arange(out_size), i1] += lam.astype(np.float32)
    return A


# ----------------------------------------------------------------------------
# Wrapper (takes PyTorch-shaped weights)
# ----------------------------------------------------------------------------
def linear_head_forward(patch_tokens, ct_w, ct_b, cv_w, cv_b, image_size,
                        *, tm=512, planes_per_step=32, out_dtype=jnp.float32):
    """patch_tokens (B,N,C); ct_w (C,C,2,2); ct_b (C,); cv_w (K,C,1,1); cv_b (K,).
    Returns (B, K, image_size, image_size) in out_dtype (f32 = module default)."""
    B, N, C = patch_tokens.shape
    H = W = int(round(N ** 0.5))
    assert H * W == N, "token count must be a perfect square"
    K = cv_w.shape[0]
    M = B * N
    vmem_budget = _vmem_budget_bytes()

    # ---- lane-dense head output: pad K to a 128 multiple when cheap ----------
    K_pad = K
    if K % 128 != 0:
        K_up = ((K + 127) // 128) * 128
        if (4 * K < 128) or (K_up - K) * 8 <= K:      # always if 4K<128, else <=12.5% extra
            K_pad = K_up

    # ---- weight packing (bf16 MXU inputs, f32 biases) -------------------------
    # deconv: out[.., co, 2i+dy, 2j+dx] = x @ ct_w[:, :, dy, dx] + ct_b
    w1p = jnp.stack([ct_w[:, :, dy, dx] for dy in range(2) for dx in range(2)],
                    axis=0).astype(jnp.bfloat16)                         # (4, C, C)
    b1p = jnp.tile(ct_b.astype(jnp.float32)[None, None, :], (4, 1, 1))   # (4, 1, C)
    w2 = cv_w[:, :, 0, 0].T.astype(jnp.bfloat16)                         # (C, K)
    b2 = cv_b.astype(jnp.float32)[None, :]                               # (1, K)
    if K_pad != K:
        w2 = jnp.pad(w2, ((0, 0), (0, K_pad - K)))
        b2 = jnp.pad(b2, ((0, 0), (0, K_pad - K)))

    # ---- head kernel tile sizing ----------------------------------------------
    tm = min(tm, M)
    if tm >= 128:
        tm = (tm // 128) * 128                  # lane/sublane friendly
    elif tm >= 16:
        tm = (tm // 16) * 16                    # bf16 packs 16 rows per sublane group
    while tm >= 32 and (M + tm - 1) // tm < 2:  # >=2 grid steps so both v7x TCs work
        tm //= 2

    def _head_vmem(t):
        fixed = (4 * C * C + C * K_pad) * 2 * 2 + (4 * C + K_pad) * 4 * 2
        per_tile = (t * C * 2 + t * 4 * K_pad * 2) * 2
        live = t * C * 4 + t * C * 2 + t * 4 * K_pad * 4
        return fixed + per_tile + live
    while tm >= 32 and _head_vmem(tm) > vmem_budget * 0.7:
        tm //= 2

    x = patch_tokens.reshape(M, C).astype(jnp.bfloat16)
    M_pad = ((M + tm - 1) // tm) * tm
    if M_pad != M:
        # TODO(synk): replace with a pl.when-masked final tile to avoid this
        # extra HBM read+write of the token matrix.
        x = jnp.pad(x, ((0, M_pad - M), (0, 0)))

    head_cost = _cost(
        flops=8 * M_pad * C * C + 8 * M_pad * C * K_pad,
        transcendentals=4 * M_pad * C,
        bytes_accessed=2 * (M_pad * C + 4 * C * C + C * K_pad + M_pad * 4 * K_pad))

    def _run_head(single_buffer):
        def const_spec(shape):
            idx = lambda m, _n=len(shape): (0,) * _n
            if single_buffer:
                return pl.BlockSpec(shape, idx, pipeline_mode=pl.Buffered(1))
            return pl.BlockSpec(shape, idx)
        return pl.pallas_call(
            _head_kernel,
            out_shape=jax.ShapeDtypeStruct((M_pad, 4 * K_pad), jnp.bfloat16),
            grid=(M_pad // tm,),
            in_specs=[
                pl.BlockSpec((tm, C), lambda m: (m, 0)),
                const_spec((4, C, C)),
                const_spec((4, 1, C)),
                const_spec((C, K_pad)),
                const_spec((1, K_pad)),
            ],
            out_specs=pl.BlockSpec((tm, 4 * K_pad), lambda m: (m, 0)),
            compiler_params=pltpu.CompilerParams(
                dimension_semantics=("parallel",),
                vmem_limit_bytes=vmem_budget),
            cost_estimate=head_cost,
        )(x, w1p, b1p, w2, b2)

    try:
        head_out = _run_head(True)       # single-buffered grid-invariant weights
    except Exception:
        head_out = _run_head(False)      # fallback: default double buffering

    # ---- pivot to plane-major, BLOCKED (dy*H+i, dx*W+j) layout -----------------
    # head_out columns are (dy, dx, k); rows are (b, i, j).
    # TODO(synk): this relayout is one XLA transpose on the smallest tensor in
    # the pipeline; doing it in-kernel for non-128-aligned (H*W, K) tiles is
    # lowering-risky, so it stays outside.
    head6 = head_out[:M].reshape(B, H, W, 2, 2, K_pad)[..., :K]   # (b,i,j,dy,dx,k)
    planes = jnp.transpose(head6, (0, 5, 3, 1, 4, 2))             # (b,k,dy,i,dx,j)
    planes = planes.reshape(B * K, 2 * H, 2 * W)                  # blocked planes, bf16

    # ---- bilinear resize, sub-pixel interleave folded into the matrices --------
    Ah = _bilinear_matrix(2 * H, image_size)
    Aw = _bilinear_matrix(2 * W, image_size)
    perm_h = np.concatenate([2 * np.arange(H) + dy for dy in range(2)])
    perm_w = np.concatenate([2 * np.arange(W) + dx for dx in range(2)])
    Ah_blk = jnp.asarray(Ah[:, perm_h]).astype(jnp.bfloat16)      # (outH, 2H)
    Aw_blkT = jnp.asarray(Aw[:, perm_w].T).astype(jnp.bfloat16)   # (2W, outW)

    Npl = B * K
    out_elt = np.dtype(out_dtype).itemsize
    P = max(1, min(planes_per_step, Npl))

    def _resize_vmem(p):
        return (2 * p * image_size * image_size * out_elt          # out double-buffer
                + 2 * p * (2 * H) * (2 * W) * 2                    # in double-buffer
                + 2 * 2 * image_size * (2 * H + 2 * W)             # interp matrices
                + image_size * (2 * W) * 4)                        # one plane's f32 temp
    while P > 1 and _resize_vmem(P) > vmem_budget * 0.7:
        P = max(1, P // 2)
    while P > 1 and (Npl + P - 1) // P < 2:                        # >=2 steps for v7x
        P = max(1, P // 2)

    Npl_pad = ((Npl + P - 1) // P) * P
    if Npl_pad != Npl:
        planes = jnp.pad(planes, ((0, Npl_pad - Npl), (0, 0), (0, 0)))

    resize_cost = _cost(
        flops=2 * Npl_pad * image_size * (2 * W) * (2 * H + image_size),
        transcendentals=0,
        bytes_accessed=Npl_pad * ((2 * H) * (2 * W) * 2
                                  + image_size * image_size * out_elt))

    def _run_resize(single_buffer):
        def const_spec(shape):
            idx = lambda i, _n=len(shape): (0,) * _n
            if single_buffer:
                return pl.BlockSpec(shape, idx, pipeline_mode=pl.Buffered(1))
            return pl.BlockSpec(shape, idx)
        return pl.pallas_call(
            _resize_kernel,
            out_shape=jax.ShapeDtypeStruct((Npl_pad, image_size, image_size), out_dtype),
            grid=(Npl_pad // P,),
            in_specs=[
                const_spec((image_size, 2 * H)),
                const_spec((2 * W, image_size)),
                pl.BlockSpec((P, 2 * H, 2 * W), lambda i: (i, 0, 0)),
            ],
            out_specs=pl.BlockSpec((P, image_size, image_size), lambda i: (i, 0, 0)),
            compiler_params=pltpu.CompilerParams(
                dimension_semantics=("parallel",),
                vmem_limit_bytes=vmem_budget),
            cost_estimate=resize_cost,
        )(Ah_blk, Aw_blkT, planes)

    try:
        resized = _run_resize(True)
    except Exception:
        resized = _run_resize(False)

    return resized[:Npl].reshape(B, K, image_size, image_size)


# ----------------------------------------------------------------------------
# Pure-JAX f32 reference (PyTorch semantics) for numerical verification
# ----------------------------------------------------------------------------
def _reference_forward(patch_tokens, ct_w, ct_b, cv_w, cv_b, image_size):
    B, N, C = patch_tokens.shape
    H = W = int(round(N ** 0.5))
    xt = patch_tokens.reshape(B, H, W, C).astype(jnp.float32)
    img = jnp.zeros((B, C, 2 * H, 2 * W), jnp.float32)
    for dy in range(2):
        for dx in range(2):
            y = jnp.einsum("bhwc,cd->bhwd", xt, ct_w[:, :, dy, dx]) + ct_b
            img = img.at[:, :, dy::2, dx::2].set(jnp.transpose(y, (0, 3, 1, 2)))
    g = 0.5 * img * (1.0 + jax.scipy.special.erf(img * (1.0 / np.sqrt(2.0))))
    logits = jnp.einsum("bchw,kc->bkhw", g, cv_w[:, :, 0, 0]) + cv_b[None, :, None, None]
    Ah = jnp.asarray(_bilinear_matrix(2 * H, image_size))
    Aw = jnp.asarray(_bilinear_matrix(2 * W, image_size))
    return jnp.einsum("oh,bkhw,pw->bkop", Ah, logits, Aw)


if __name__ == "__main__":
    # Small shapes consistent with the module: patch grid 4x4 (N=16), C=32,
    # num_classes=8, image_size=16 (i.e. patch_size=4).
    B, C, Hp, K, image_size = 2, 32, 4, 8, 16
    N = Hp * Hp

    key = jax.random.PRNGKey(0)
    k1, k2, k3, k4, k5 = jax.random.split(key, 5)
    patch_tokens = jax.random.normal(k1, (B, N, C), jnp.float32)

    # PyTorch parameter shapes:
    #   ConvTranspose2d: weight (C_in, C_out, 2, 2), bias (C_out,)
    #   Conv2d 1x1     : weight (K, C, 1, 1),        bias (K,)
    ct_w = jax.random.normal(k2, (C, C, 2, 2), jnp.float32) * 0.05
    ct_b = jax.random.normal(k3, (C,), jnp.float32) * 0.05
    cv_w = jax.random.normal(k4, (K, C, 1, 1), jnp.float32) * 0.05
    cv_b = jax.random.normal(k5, (K,), jnp.float32) * 0.05

    out = linear_head_forward(patch_tokens, ct_w, ct_b, cv_w, cv_b, image_size)
    out = jax.block_until_ready(out)
    assert out.shape == (B, K, image_size, image_size), out.shape

    ref = jax.block_until_ready(
        _reference_forward(patch_tokens, ct_w, ct_b, cv_w, cv_b, image_size))
    max_err = float(jnp.max(jnp.abs(out - ref)))
    # bf16 MXU inputs + approximate erf/reciprocal: expect ~1e-3 abs error.
    assert max_err < 2e-2, f"numerical mismatch vs f32 reference: max_err={max_err}"

    print("KERNEL_OK")
</pallas_src>

<mosaic_0001>
module attributes {stable_mosaic.version = 11 : i64} {
  func.func @_head_kernel(%arg0: i32, %arg1: memref<16x32xbf16, #tpu.memory_space<vmem>>, %arg2: memref<4x32x32xbf16, #tpu.memory_space<vmem>>, %arg3: memref<4x1x32xf32, #tpu.memory_space<vmem>>, %arg4: memref<32x128xbf16, #tpu.memory_space<vmem>>, %arg5: memref<1x128xf32, #tpu.memory_space<vmem>>, %arg6: memref<16x512xbf16, #tpu.memory_space<vmem>>) attributes {dimension_semantics = [#tpu.dimension_semantics<parallel>], iteration_bounds = array<i64: 2>, scalar_prefetch = 0 : i64, scratch_operands = 0 : i64, tpu.core_type = #tpu.core_type<tc>, window_params = [{transform_indices = @transform_0, window_bounds = array<i64: 16, 32>}, {pipeline_mode = #tpu.pipeline_mode<synchronous>, transform_indices = @transform_1, window_bounds = array<i64: 4, 32, 32>}, {pipeline_mode = #tpu.pipeline_mode<synchronous>, transform_indices = @transform_2, window_bounds = array<i64: 4, 1, 32>}, {pipeline_mode = #tpu.pipeline_mode<synchronous>, transform_indices = @transform_3, window_bounds = array<i64: 32, 128>}, {pipeline_mode = #tpu.pipeline_mode<synchronous>, transform_indices = @transform_4, window_bounds = array<i64: 1, 128>}, {transform_indices = @transform_5, window_bounds = array<i64: 16, 512>}]} {
    %c0 = arith.constant 0 : index
    %c0_0 = arith.constant 0 : index
    %0 = vector.load %arg1[%c0, %c0_0] : memref<16x32xbf16, #tpu.memory_space<vmem>>, vector<16x32xbf16>
    %c0_1 = arith.constant 0 : index
    %c0_2 = arith.constant 0 : index
    %1 = vector.load %arg4[%c0_1, %c0_2] : memref<32x128xbf16, #tpu.memory_space<vmem>>, vector<32x128xbf16>
    %c0_3 = arith.constant 0 : index
    %c0_4 = arith.constant 0 : index
    %2 = vector.load %arg5[%c0_3, %c0_4] : memref<1x128xf32, #tpu.memory_space<vmem>>, vector<1x128xf32>
    %c0_5 = arith.constant 0 : index
    %c0_6 = arith.constant 0 : index
    %c0_7 = arith.constant 0 : index
    %3 = vector.load %arg2[%c0_5, %c0_6, %c0_7] : memref<4x32x32xbf16, #tpu.memory_space<vmem>>, vector<1x32x32xbf16>
    %4 = vector.shape_cast %3 : vector<1x32x32xbf16> to vector<32x32xbf16>
    %cst = arith.constant dense<0.000000e+00> : vector<16x32xf32>
    %5 = tpu.matmul %0, %4, %cst {dimension_numbers = #tpu.dot_dimension_numbers<[1], [0], [0], [1], [0, 0, 1, 1], [], []>} : vector<16x32xbf16>, vector<32x32xbf16>, vector<16x32xf32> -> vector<16x32xf32>
    %c0_8 = arith.constant 0 : index
    %c0_9 = arith.constant 0 : index
    %c0_10 = arith.constant 0 : index
    %6 = vector.load %arg3[%c0_8, %c0_9, %c0_10] : memref<4x1x32xf32, #tpu.memory_space<vmem>>, vector<1x1x32xf32>
    %7 = vector.shape_cast %6 : vector<1x1x32xf32> to vector<1x32xf32>
    %8 = vector.broadcast %7 : vector<1x32xf32> to vector<16x32xf32>
    %9 = arith.addf %5, %8 : vector<16x32xf32>
    %cst_11 = arith.constant 0.707106769 : f32
    %10 = vector.broadcast %cst_11 : f32 to vector<16x32xf32>
    %11 = arith.mulf %9, %10 : vector<16x32xf32>
    %12 = math.absf %11 : vector<16x32xf32>
    %cst_12 = arith.constant 0.327591091 : f32
    %13 = vector.broadcast %cst_12 : f32 to vector<16x32xf32>
    %14 = arith.mulf %13, %12 : vector<16x32xf32>
    %cst_13 = arith.constant 1.000000e+00 : f32
    %15 = vector.broadcast %cst_13 : f32 to vector<16x32xf32>
    %16 = arith.addf %15, %14 : vector<16x32xf32>
    %17 = tpu.reciprocal %16 {approx = true} : vector<16x32xf32> -> vector<16x32xf32>
    %cst_14 = arith.constant 1.06140542 : f32
    %18 = vector.broadcast %cst_14 : f32 to vector<16x32xf32>
    %19 = arith.mulf %18, %17 : vector<16x32xf32>
    %cst_15 = arith.constant -1.45315206 : f32
    %20 = vector.broadcast %cst_15 : f32 to vector<16x32xf32>
    %21 = arith.addf %19, %20 : vector<16x32xf32>
    %22 = arith.mulf %21, %17 : vector<16x32xf32>
    %cst_16 = arith.constant 1.42141378 : f32
    %23 = vector.broadcast %cst_16 : f32 to vector<16x32xf32>
    %24 = arith.addf %22, %23 : vector<16x32xf32>
    %25 = arith.mulf %24, %17 : vector<16x32xf32>
    %cst_17 = arith.constant -0.284496725 : f32
    %26 = vector.broadcast %cst_17 : f32 to vector<16x32xf32>
    %27 = arith.addf %25, %26 : vector<16x32xf32>
    %28 = arith.mulf %27, %17 : vector<16x32xf32>
    %cst_18 = arith.constant 0.254829586 : f32
    %29 = vector.broadcast %cst_18 : f32 to vector<16x32xf32>
    %30 = arith.addf %28, %29 : vector<16x32xf32>
    %31 = arith.mulf %30, %17 : vector<16x32xf32>
    %cst_19 = arith.constant 0.000000e+00 : f32
    %32 = vector.broadcast %cst_19 : f32 to vector<16x32xf32>
    %33 = arith.subf %32, %12 : vector<16x32xf32>
    %34 = arith.mulf %33, %12 : vector<16x32xf32>
    %35 = math.exp %34 : vector<16x32xf32>
    %36 = arith.mulf %31, %35 : vector<16x32xf32>
    %cst_20 = arith.constant 1.000000e+00 : f32
    %37 = vector.broadcast %cst_20 : f32 to vector<16x32xf32>
    %38 = arith.subf %37, %36 : vector<16x32xf32>
    %cst_21 = arith.constant 0.000000e+00 : f32
    %39 = vector.broadcast %cst_21 : f32 to vector<16x32xf32>
    %40 = arith.cmpf oge, %11, %39 : vector<16x32xf32>
    %cst_22 = arith.constant 0.000000e+00 : f32
    %41 = vector.broadcast %cst_22 : f32 to vector<16x32xf32>
    %42 = arith.subf %41, %38 : vector<16x32xf32>
    %43 = arith.select %40, %38, %42 : vector<16x32xi1>, vector<16x32xf32>
    %cst_23 = arith.constant 5.000000e-01 : f32
    %44 = vector.broadcast %cst_23 : f32 to vector<16x32xf32>
    %45 = arith.mulf %44, %9 : vector<16x32xf32>
    %cst_24 = arith.constant 1.000000e+00 : f32
    %46 = vector.broadcast %cst_24 : f32 to vector<16x32xf32>
    %47 = arith.addf %46, %43 : vector<16x32xf32>
    %48 = arith.mulf %45, %47 : vector<16x32xf32>
    %49 = arith.truncf %48 : vector<16x32xf32> to vector<16x32xbf16>
    %cst_25 = arith.constant dense<0.000000e+00> : vector<16x128xf32>
    %50 = tpu.matmul %49, %1, %cst_25 {dimension_numbers = #tpu.dot_dimension_numbers<[1], [0], [0], [1], [0, 0, 1, 1], [], []>} : vector<16x32xbf16>, vector<32x128xbf16>, vector<16x128xf32> -> vector<16x128xf32>
    %51 = vector.broadcast %2 : vector<1x128xf32> to vector<16x128xf32>
    %52 = arith.addf %50, %51 : vector<16x128xf32>
    %53 = arith.truncf %52 : vector<16x128xf32> to vector<16x128xbf16>
    %c0_26 = arith.constant 0 : index
    %c0_27 = arith.constant 0 : index
    %54 = vector.load %arg6[%c0_26, %c0_27] : memref<16x512xbf16, #tpu.memory_space<vmem>>, vector<16x128xbf16>
    tpu.vector_store %arg6[%c0_26, %c0_27], %53 {strides = array<i32>} : memref<16x512xbf16, #tpu.memory_space<vmem>>, vector<16x128xbf16>,
    %c1 = arith.constant 1 : index
    %c0_28 = arith.constant 0 : index
    %c0_29 = arith.constant 0 : index
    %55 = vector.load %arg2[%c1, %c0_28, %c0_29] : memref<4x32x32xbf16, #tpu.memory_space<vmem>>, vector<1x32x32xbf16>
    %56 = vector.shape_cast %55 : vector<1x32x32xbf16> to vector<32x32xbf16>
    %cst_30 = arith.constant dense<0.000000e+00> : vector<16x32xf32>
    %57 = tpu.matmul %0, %56, %cst_30 {dimension_numbers = #tpu.dot_dimension_numbers<[1], [0], [0], [1], [0, 0, 1, 1], [], []>} : vector<16x32xbf16>, vector<32x32xbf16>, vector<16x32xf32> -> vector<16x32xf32>
    %c1_31 = arith.constant 1 : index
    %c0_32 = arith.constant 0 : index
    %c0_33 = arith.constant 0 : index
    %58 = vector.load %arg3[%c1_31, %c0_32, %c0_33] : memref<4x1x32xf32, #tpu.memory_space<vmem>>, vector<1x1x32xf32>
    %59 = vector.shape_cast %58 : vector<1x1x32xf32> to vector<1x32xf32>
    %60 = vector.broadcast %59 : vector<1x32xf32> to vector<16x32xf32>
    %61 = arith.addf %57, %60 : vector<16x32xf32>
    %cst_34 = arith.constant 0.707106769 : f32
    %62 = vector.broadcast %cst_34 : f32 to vector<16x32xf32>
    %63 = arith.mulf %61, %62 : vector<16x32xf32>
    %64 = math.absf %63 : vector<16x32xf32>
    %cst_35 = arith.constant 0.327591091 : f32
    %65 = vector.broadcast %cst_35 : f32 to vector<16x32xf32>
    %66 = arith.mulf %65, %64 : vector<16x32xf32>
    %cst_36 = arith.constant 1.000000e+00 : f32
    %67 = vector.broadcast %cst_36 : f32 to vector<16x32xf32>
    %68 = arith.addf %67, %66 : vector<16x32xf32>
    %69 = tpu.reciprocal %68 {approx = true} : vector<16x32xf32> -> vector<16x32xf32>
    %cst_37 = arith.constant 1.06140542 : f32
    %70 = vector.broadcast %cst_37 : f32 to vector<16x32xf32>
    %71 = arith.mulf %70, %69 : vector<16x32xf32>
    %cst_38 = arith.constant -1.45315206 : f32
    %72 = vector.broadcast %cst_38 : f32 to vector<16x32xf32>
    %73 = arith.addf %71, %72 : vector<16x32xf32>
    %74 = arith.mulf %73, %69 : vector<16x32xf32>
    %cst_39 = arith.constant 1.42141378 : f32
    %75 = vector.broadcast %cst_39 : f32 to vector<16x32xf32>
    %76 = arith.addf %74, %75 : vector<16x32xf32>
    %77 = arith.mulf %76, %69 : vector<16x32xf32>
    %cst_40 = arith.constant -0.284496725 : f32
    %78 = vector.broadcast %cst_40 : f32 to vector<16x32xf32>
    %79 = arith.addf %77, %78 : vector<16x32xf32>
    %80 = arith.mulf %79, %69 : vector<16x32xf32>
    %cst_41 = arith.constant 0.254829586 : f32
    %81 = vector.broadcast %cst_41 : f32 to vector<16x32xf32>
    %82 = arith.addf %80, %81 : vector<16x32xf32>
    %83 = arith.mulf %82, %69 : vector<16x32xf32>
    %cst_42 = arith.constant 0.000000e+00 : f32
    %84 = vector.broadcast %cst_42 : f32 to vector<16x32xf32>
    %85 = arith.subf %84, %64 : vector<16x32xf32>
    %86 = arith.mulf %85, %64 : vector<16x32xf32>
    %87 = math.exp %86 : vector<16x32xf32>
    %88 = arith.mulf %83, %87 : vector<16x32xf32>
    %cst_43 = arith.constant 1.000000e+00 : f32
    %89 = vector.broadcast %cst_43 : f32 to vector<16x32xf32>
    %90 = arith.subf %89, %88 : vector<16x32xf32>
    %cst_44 = arith.constant 0.000000e+00 : f32
    %91 = vector.broadcast %cst_44 : f32 to vector<16x32xf32>
    %92 = arith.cmpf oge, %63, %91 : vector<16x32xf32>
    %cst_45 = arith.constant 0.000000e+00 : f32
    %93 = vector.broadcast %cst_45 : f32 to vector<16x32xf32>
    %94 = arith.subf %93, %90 : vector<16x32xf32>
    %95 = arith.select %92, %90, %94 : vector<16x32xi1>, vector<16x32xf32>
    %cst_46 = arith.constant 5.000000e-01 : f32
    %96 = vector.broadcast %cst_46 : f32 to vector<16x32xf32>
    %97 = arith.mulf %96, %61 : vector<16x32xf32>
    %cst_47 = arith.constant 1.000000e+00 : f32
    %98 = vector.broadcast %cst_47 : f32 to vector<16x32xf32>
    %99 = arith.addf %98, %95 : vector<16x32xf32>
    %100 = arith.mulf %97, %99 : vector<16x32xf32>
    %101 = arith.truncf %100 : vector<16x32xf32> to vector<16x32xbf16>
    %cst_48 = arith.constant dense<0.000000e+00> : vector<16x128xf32>
    %102 = tpu.matmul %101, %1, %cst_48 {dimension_numbers = #tpu.dot_dimension_numbers<[1], [0], [0], [1], [0, 0, 1, 1], [], []>} : vector<16x32xbf16>, vector<32x128xbf16>, vector<16x128xf32> -> vector<16x128xf32>
    %103 = vector.broadcast %2 : vector<1x128xf32> to vector<16x128xf32>
    %104 = arith.addf %102, %103 : vector<16x128xf32>
    %105 = arith.truncf %104 : vector<16x128xf32> to vector<16x128xbf16>
    %c0_49 = arith.constant 0 : index
    %c128 = arith.constant 128 : index
    %106 = vector.load %arg6[%c0_49, %c128] : memref<16x512xbf16, #tpu.memory_space<vmem>>, vector<16x128xbf16>
    tpu.vector_store %arg6[%c0_49, %c128], %105 {strides = array<i32>} : memref<16x512xbf16, #tpu.memory_space<vmem>>, vector<16x128xbf16>,
    %c2 = arith.constant 2 : index
    %c0_50 = arith.constant 0 : index
    %c0_51 = arith.constant 0 : index
    %107 = vector.load %arg2[%c2, %c0_50, %c0_51] : memref<4x32x32xbf16, #tpu.memory_space<vmem>>, vector<1x32x32xbf16>
    %108 = vector.shape_cast %107 : vector<1x32x32xbf16> to vector<32x32xbf16>
    %cst_52 = arith.constant dense<0.000000e+00> : vector<16x32xf32>
    %109 = tpu.matmul %0, %108, %cst_52 {dimension_numbers = #tpu.dot_dimension_numbers<[1], [0], [0], [1], [0, 0, 1, 1], [], []>} : vector<16x32xbf16>, vector<32x32xbf16>, vector<16x32xf32> -> vector<16x32xf32>
    %c2_53 = arith.constant 2 : index
    %c0_54 = arith.constant 0 : index
    %c0_55 = arith.constant 0 : index
    %110 = vector.load %arg3[%c2_53, %c0_54, %c0_55] : memref<4x1x32xf32, #tpu.memory_space<vmem>>, vector<1x1x32xf32>
    %111 = vector.shape_cast %110 : vector<1x1x32xf32> to vector<1x32xf32>
    %112 = vector.broadcast %111 : vector<1x32xf32> to vector<16x32xf32>
    %113 = arith.addf %109, %112 : vector<16x32xf32>
    %cst_56 = arith.constant 0.707106769 : f32
    %114 = vector.broadcast %cst_56 : f32 to vector<16x32xf32>
    %115 = arith.mulf %113, %114 : vector<16x32xf32>
    %116 = math.absf %115 : vector<16x32xf32>
    %cst_57 = arith.constant 0.327591091 : f32
    %117 = vector.broadcast %cst_57 : f32 to vector<16x32xf32>
    %118 = arith.mulf %117, %116 : vector<16x32xf32>
    %cst_58 = arith.constant 1.000000e+00 : f32
    %119 = vector.broadcast %cst_58 : f32 to vector<16x32xf32>
    %120 = arith.addf %119, %118 : vector<16x32xf32>
    %121 = tpu.reciprocal %120 {approx = true} : vector<16x32xf32> -> vector<16x32xf32>
    %cst_59 = arith.constant 1.06140542 : f32
    %122 = vector.broadcast %cst_59 : f32 to vector<16x32xf32>
    %123 = arith.mulf %122, %121 : vector<16x32xf32>
    %cst_60 = arith.constant -1.45315206 : f32
    %124 = vector.broadcast %cst_60 : f32 to vector<16x32xf32>
    %125 = arith.addf %123, %124 : vector<16x32xf32>
    %126 = arith.mulf %125, %121 : vector<16x32xf32>
    %cst_61 = arith.constant 1.42141378 : f32
    %127 = vector.broadcast %cst_61 : f32 to vector<16x32xf32>
    %128 = arith.addf %126, %127 : vector<16x32xf32>
    %129 = arith.mulf %128, %121 : vector<16x32xf32>
    %cst_62 = arith.constant -0.284496725 : f32
    %130 = vector.broadcast %cst_62 : f32 to vector<16x32xf32>
    %131 = arith.addf %129, %130 : vector<16x32xf32>
    %132 = arith.mulf %131, %121 : vector<16x32xf32>
    %cst_63 = arith.constant 0.254829586 : f32
    %133 = vector.broadcast %cst_63 : f32 to vector<16x32xf32>
    %134 = arith.addf %132, %133 : vector<16x32xf32>
    %135 = arith.mulf %134, %121 : vector<16x32xf32>
    %cst_64 = arith.constant 0.000000e+00 : f32
    %136 = vector.broadcast %cst_64 : f32 to vector<16x32xf32>
    %137 = arith.subf %136, %116 : vector<16x32xf32>
    %138 = arith.mulf %137, %116 : vector<16x32xf32>
    %139 = math.exp %138 : vector<16x32xf32>
    %140 = arith.mulf %135, %139 : vector<16x32xf32>
    %cst_65 = arith.constant 1.000000e+00 : f32
    %141 = vector.broadcast %cst_65 : f32 to vector<16x32xf32>
    %142 = arith.subf %141, %140 : vector<16x32xf32>
    %cst_66 = arith.constant 0.000000e+00 : f32
    %143 = vector.broadcast %cst_66 : f32 to vector<16x32xf32>
    %144 = arith.cmpf oge, %115, %143 : vector<16x32xf32>
    %cst_67 = arith.constant 0.000000e+00 : f32
    %145 = vector.broadcast %cst_67 : f32 to vector<16x32xf32>
    %146 = arith.subf %145, %142 : vector<16x32xf32>
    %147 = arith.select %144, %142, %146 : vector<16x32xi1>, vector<16x32xf32>
    %cst_68 = arith.constant 5.000000e-01 : f32
    %148 = vector.broadcast %cst_68 : f32 to vector<16x32xf32>
    %149 = arith.mulf %148, %113 : vector<16x32xf32>
    %cst_69 = arith.constant 1.000000e+00 : f32
    %150 = vector.broadcast %cst_69 : f32 to vector<16x32xf32>
    %151 = arith.addf %150, %147 : vector<16x32xf32>
    %152 = arith.mulf %149, %151 : vector<16x32xf32>
    %153 = arith.truncf %152 : vector<16x32xf32> to vector<16x32xbf16>
    %cst_70 = arith.constant dense<0.000000e+00> : vector<16x128xf32>
    %154 = tpu.matmul %153, %1, %cst_70 {dimension_numbers = #tpu.dot_dimension_numbers<[1], [0], [0], [1], [0, 0, 1, 1], [], []>} : vector<16x32xbf16>, vector<32x128xbf16>, vector<16x128xf32> -> vector<16x128xf32>
    %155 = vector.broadcast %2 : vector<1x128xf32> to vector<16x128xf32>
    %156 = arith.addf %154, %155 : vector<16x128xf32>
    %157 = arith.truncf %156 : vector<16x128xf32> to vector<16x128xbf16>
    %c0_71 = arith.constant 0 : index
    %c256 = arith.constant 256 : index
    %158 = vector.load %arg6[%c0_71, %c256] : memref<16x512xbf16, #tpu.memory_space<vmem>>, vector<16x128xbf16>
    tpu.vector_store %arg6[%c0_71, %c256], %157 {strides = array<i32>} : memref<16x512xbf16, #tpu.memory_space<vmem>>, vector<16x128xbf16>,
    %c3 = arith.constant 3 : index
    %c0_72 = arith.constant 0 : index
    %c0_73 = arith.constant 0 : index
    %159 = vector.load %arg2[%c3, %c0_72, %c0_73] : memref<4x32x32xbf16, #tpu.memory_space<vmem>>, vector<1x32x32xbf16>
    %160 = vector.shape_cast %159 : vector<1x32x32xbf16> to vector<32x32xbf16>
    %cst_74 = arith.constant dense<0.000000e+00> : vector<16x32xf32>
    %161 = tpu.matmul %0, %160, %cst_74 {dimension_numbers = #tpu.dot_dimension_numbers<[1], [0], [0], [1], [0, 0, 1, 1], [], []>} : vector<16x32xbf16>, vector<32x32xbf16>, vector<16x32xf32> -> vector<16x32xf32>
    %c3_75 = arith.constant 3 : index
    %c0_76 = arith.constant 0 : index
    %c0_77 = arith.constant 0 : index
    %162 = vector.load %arg3[%c3_75, %c0_76, %c0_77] : memref<4x1x32xf32, #tpu.memory_space<vmem>>, vector<1x1x32xf32>
    %163 = vector.shape_cast %162 : vector<1x1x32xf32> to vector<1x32xf32>
    %164 = vector.broadcast %163 : vector<1x32xf32> to vector<16x32xf32>
    %165 = arith.addf %161, %164 : vector<16x32xf32>
    %cst_78 = arith.constant 0.707106769 : f32
    %166 = vector.broadcast %cst_78 : f32 to vector<16x32xf32>
    %167 = arith.mulf %165, %166 : vector<16x32xf32>
    %168 = math.absf %167 : vector<16x32xf32>
    %cst_79 = arith.constant 0.327591091 : f32
    %169 = vector.broadcast %cst_79 : f32 to vector<16x32xf32>
    %170 = arith.mulf %169, %168 : vector<16x32xf32>
    %cst_80 = arith.constant 1.000000e+00 : f32
    %171 = vector.broadcast %cst_80 : f32 to vector<16x32xf32>
    %172 = arith.addf %171, %170 : vector<16x32xf32>
    %173 = tpu.reciprocal %172 {approx = true} : vector<16x32xf32> -> vector<16x32xf32>
    %cst_81 = arith.constant 1.06140542 : f32
    %174 = vector.broadcast %cst_81 : f32 to vector<16x32xf32>
    %175 = arith.mulf %174, %173 : vector<16x32xf32>
    %cst_82 = arith.constant -1.45315206 : f32
    %176 = vector.broadcast %cst_82 : f32 to vector<16x32xf32>
    %177 = arith.addf %175, %176 : vector<16x32xf32>
    %178 = arith.mulf %177, %173 : vector<16x32xf32>
    %cst_83 = arith.constant 1.42141378 : f32
    %179 = vector.broadcast %cst_83 : f32 to vector<16x32xf32>
    %180 = arith.addf %178, %179 : vector<16x32xf32>
    %181 = arith.mulf %180, %173 : vector<16x32xf32>
    %cst_84 = arith.constant -0.284496725 : f32
    %182 = vector.broadcast %cst_84 : f32 to vector<16x32xf32>
    %183 = arith.addf %181, %182 : vector<16x32xf32>
    %184 = arith.mulf %183, %173 : vector<16x32xf32>
    %cst_85 = arith.constant 0.254829586 : f32
    %185 = vector.broadcast %cst_85 : f32 to vector<16x32xf32>
    %186 = arith.addf %184, %185 : vector<16x32xf32>
    %187 = arith.mulf %186, %173 : vector<16x32xf32>
    %cst_86 = arith.constant 0.000000e+00 : f32
    %188 = vector.broadcast %cst_86 : f32 to vector<16x32xf32>
    %189 = arith.subf %188, %168 : vector<16x32xf32>
    %190 = arith.mulf %189, %168 : vector<16x32xf32>
    %191 = math.exp %190 : vector<16x32xf32>
    %192 = arith.mulf %187, %191 : vector<16x32xf32>
    %cst_87 = arith.constant 1.000000e+00 : f32
    %193 = vector.broadcast %cst_87 : f32 to vector<16x32xf32>
    %194 = arith.subf %193, %192 : vector<16x32xf32>
    %cst_88 = arith.constant 0.000000e+00 : f32
    %195 = vector.broadcast %cst_88 : f32 to vector<16x32xf32>
    %196 = arith.cmpf oge, %167, %195 : vector<16x32xf32>
    %cst_89 = arith.constant 0.000000e+00 : f32
    %197 = vector.broadcast %cst_89 : f32 to vector<16x32xf32>
    %198 = arith.subf %197, %194 : vector<16x32xf32>
    %199 = arith.select %196, %194, %198 : vector<16x32xi1>, vector<16x32xf32>
    %cst_90 = arith.constant 5.000000e-01 : f32
    %200 = vector.broadcast %cst_90 : f32 to vector<16x32xf32>
    %201 = arith.mulf %200, %165 : vector<16x32xf32>
    %cst_91 = arith.constant 1.000000e+00 : f32
    %202 = vector.broadcast %cst_91 : f32 to vector<16x32xf32>
    %203 = arith.addf %202, %199 : vector<16x32xf32>
    %204 = arith.mulf %201, %203 : vector<16x32xf32>
    %205 = arith.truncf %204 : vector<16x32xf32> to vector<16x32xbf16>
    %cst_92 = arith.constant dense<0.000000e+00> : vector<16x128xf32>
    %206 = tpu.matmul %205, %1, %cst_92 {dimension_numbers = #tpu.dot_dimension_numbers<[1], [0], [0], [1], [0, 0, 1, 1], [], []>} : vector<16x32xbf16>, vector<32x128xbf16>, vector<16x128xf32> -> vector<16x128xf32>
    %207 = vector.broadcast %2 : vector<1x128xf32> to vector<16x128xf32>
    %208 = arith.addf %206, %207 : vector<16x128xf32>
    %209 = arith.truncf %208 : vector<16x128xf32> to vector<16x128xbf16>
    %c0_93 = arith.constant 0 : index
    %c384 = arith.constant 384 : index
    %210 = vector.load %arg6[%c0_93, %c384] : memref<16x512xbf16, #tpu.memory_space<vmem>>, vector<16x128xbf16>
    tpu.vector_store %arg6[%c0_93, %c384], %209 {strides = array<i32>} : memref<16x512xbf16, #tpu.memory_space<vmem>>, vector<16x128xbf16>,
    return
  }
  func.func @transform_0(%arg0: i32) -> (i32, i32) {
    %c0_i32 = arith.constant 0 : i32
    %c0_i32_0 = arith.constant 0 : i32
    return %arg0, %c0_i32 : i32, i32
  }
  func.func @transform_1(%arg0: i32) -> (i32, i32, i32) {
    %c0_i32 = arith.constant 0 : i32
    %c0_i32_0 = arith.constant 0 : i32
    %c0_i32_1 = arith.constant 0 : i32
    %c0_i32_2 = arith.constant 0 : i32
    return %c0_i32, %c0_i32_0, %c0_i32_1 : i32, i32, i32
  }
  func.func @transform_2(%arg0: i32) -> (i32, i32, i32) {
    %c0_i32 = arith.constant 0 : i32
    %c0_i32_0 = arith.constant 0 : i32
    %c0_i32_1 = arith.constant 0 : i32
    %c0_i32_2 = arith.constant 0 : i32
    return %c0_i32, %c0_i32_0, %c0_i32_1 : i32, i32, i32
  }
  func.func @transform_3(%arg0: i32) -> (i32, i32) {
    %c0_i32 = arith.constant 0 : i32
    %c0_i32_0 = arith.constant 0 : i32
    %c0_i32_1 = arith.constant 0 : i32
    return %c0_i32, %c0_i32_0 : i32, i32
  }
  func.func @transform_4(%arg0: i32) -> (i32, i32) {
    %c0_i32 = arith.constant 0 : i32
    %c0_i32_0 = arith.constant 0 : i32
    %c0_i32_1 = arith.constant 0 : i32
    return %c0_i32, %c0_i32_0 : i32, i32
  }
  func.func @transform_5(%arg0: i32) -> (i32, i32) {
    %c0_i32 = arith.constant 0 : i32
    %c0_i32_0 = arith.constant 0 : i32
    return %arg0, %c0_i32 : i32, i32
  }
}

module attributes {stable_mosaic.version = 11 : i64} {
  func.func @_head_kernel(%arg0: i32, %arg1: memref<16x32xbf16, #tpu.memory_space<vmem>>, %arg2: memref<4x32x32xbf16, #tpu.memory_space<vmem>>, %arg3: memref<4x1x32xf32, #tpu.memory_space<vmem>>, %arg4: memref<32x128xbf16, #tpu.memory_space<vmem>>, %arg5: memref<1x128xf32, #tpu.memory_space<vmem>>, %arg6: memref<16x512xbf16, #tpu.memory_space<vmem>>) attributes {dimension_semantics = [#tpu.dimension_semantics<parallel>], iteration_bounds = array<i64: 2>, scalar_prefetch = 0 : i64, scratch_operands = 0 : i64, tpu.core_type = #tpu.core_type<tc>, window_params = [{transform_indices = @transform_0, window_bounds = array<i64: 16, 32>}, {pipeline_mode = #tpu.pipeline_mode<synchronous>, transform_indices = @transform_1, window_bounds = array<i64: 4, 32, 32>}, {pipeline_mode = #tpu.pipeline_mode<synchronous>, transform_indices = @transform_2, window_bounds = array<i64: 4, 1, 32>}, {pipeline_mode = #tpu.pipeline_mode<synchronous>, transform_indices = @transform_3, window_bounds = array<i64: 32, 128>}, {pipeline_mode = #tpu.pipeline_mode<synchronous>, transform_indices = @transform_4, window_bounds = array<i64: 1, 128>}, {transform_indices = @transform_5, window_bounds = array<i64: 16, 512>}]} {
    %c0 = arith.constant 0 : index
    %c0_0 = arith.constant 0 : index
    %0 = vector.load %arg1[%c0, %c0_0] : memref<16x32xbf16, #tpu.memory_space<vmem>>, vector<16x32xbf16>
    %c0_1 = arith.constant 0 : index
    %c0_2 = arith.constant 0 : index
    %1 = vector.load %arg4[%c0_1, %c0_2] : memref<32x128xbf16, #tpu.memory_space<vmem>>, vector<32x128xbf16>
    %c0_3 = arith.constant 0 : index
    %c0_4 = arith.constant 0 : index
    %2 = vector.load %arg5[%c0_3, %c0_4] : memref<1x128xf32, #tpu.memory_space<vmem>>, vector<1x128xf32>
    %c0_5 = arith.constant 0 : index
    %c0_6 = arith.constant 0 : index
    %c0_7 = arith.constant 0 : index
    %3 = vector.load %arg2[%c0_5, %c0_6, %c0_7] : memref<4x32x32xbf16, #tpu.memory_space<vmem>>, vector<1x32x32xbf16>
    %4 = vector.shape_cast %3 : vector<1x32x32xbf16> to vector<32x32xbf16>
    %cst = arith.constant dense<0.000000e+00> : vector<16x32xf32>
    %5 = tpu.matmul %0, %4, %cst {dimension_numbers = #tpu.dot_dimension_numbers<[1], [0], [0], [1], [0, 0, 1, 1], [], []>} : vector<16x32xbf16>, vector<32x32xbf16>, vector<16x32xf32> -> vector<16x32xf32>
    %c0_8 = arith.constant 0 : index
    %c0_9 = arith.constant 0 : index
    %c0_10 = arith.constant 0 : index
    %6 = vector.load %arg3[%c0_8, %c0_9, %c0_10] : memref<4x1x32xf32, #tpu.memory_space<vmem>>, vector<1x1x32xf32>
    %7 = vector.shape_cast %6 : vector<1x1x32xf32> to vector<1x32xf32>
    %8 = vector.broadcast %7 : vector<1x32xf32> to vector<16x32xf32>
    %9 = arith.addf %5, %8 : vector<16x32xf32>
    %cst_11 = arith.constant 0.707106769 : f32
    %10 = vector.broadcast %cst_11 : f32 to vector<16x32xf32>
    %11 = arith.mulf %9, %10 : vector<16x32xf32>
    %12 = math.absf %11 : vector<16x32xf32>
    %cst_12 = arith.constant 0.327591091 : f32
    %13 = vector.broadcast %cst_12 : f32 to vector<16x32xf32>
    %14 = arith.mulf %13, %12 : vector<16x32xf32>
    %cst_13 = arith.constant 1.000000e+00 : f32
    %15 = vector.broadcast %cst_13 : f32 to vector<16x32xf32>
    %16 = arith.addf %15, %14 : vector<16x32xf32>
    %17 = tpu.reciprocal %16 {approx = true} : vector<16x32xf32> -> vector<16x32xf32>
    %cst_14 = arith.constant 1.06140542 : f32
    %18 = vector.broadcast %cst_14 : f32 to vector<16x32xf32>
    %19 = arith.mulf %18, %17 : vector<16x32xf32>
    %cst_15 = arith.constant -1.45315206 : f32
    %20 = vector.broadcast %cst_15 : f32 to vector<16x32xf32>
    %21 = arith.addf %19, %20 : vector<16x32xf32>
    %22 = arith.mulf %21, %17 : vector<16x32xf32>
    %cst_16 = arith.constant 1.42141378 : f32
    %23 = vector.broadcast %cst_16 : f32 to vector<16x32xf32>
    %24 = arith.addf %22, %23 : vector<16x32xf32>
    %25 = arith.mulf %24, %17 : vector<16x32xf32>
    %cst_17 = arith.constant -0.284496725 : f32
    %26 = vector.broadcast %cst_17 : f32 to vector<16x32xf32>
    %27 = arith.addf %25, %26 : vector<16x32xf32>
    %28 = arith.mulf %27, %17 : vector<16x32xf32>
    %cst_18 = arith.constant 0.254829586 : f32
    %29 = vector.broadcast %cst_18 : f32 to vector<16x32xf32>
    %30 = arith.addf %28, %29 : vector<16x32xf32>
    %31 = arith.mulf %30, %17 : vector<16x32xf32>
    %cst_19 = arith.constant 0.000000e+00 : f32
    %32 = vector.broadcast %cst_19 : f32 to vector<16x32xf32>
    %33 = arith.subf %32, %12 : vector<16x32xf32>
    %34 = arith.mulf %33, %12 : vector<16x32xf32>
    %35 = math.exp %34 : vector<16x32xf32>
    %36 = arith.mulf %31, %35 : vector<16x32xf32>
    %cst_20 = arith.constant 1.000000e+00 : f32
    %37 = vector.broadcast %cst_20 : f32 to vector<16x32xf32>
    %38 = arith.subf %37, %36 : vector<16x32xf32>
    %cst_21 = arith.constant 0.000000e+00 : f32
    %39 = vector.broadcast %cst_21 : f32 to vector<16x32xf32>
    %40 = arith.cmpf oge, %11, %39 : vector<16x32xf32>
    %cst_22 = arith.constant 0.000000e+00 : f32
    %41 = vector.broadcast %cst_22 : f32 to vector<16x32xf32>
    %42 = arith.subf %41, %38 : vector<16x32xf32>
    %43 = arith.select %40, %38, %42 : vector<16x32xi1>, vector<16x32xf32>
    %cst_23 = arith.constant 5.000000e-01 : f32
    %44 = vector.broadcast %cst_23 : f32 to vector<16x32xf32>
    %45 = arith.mulf %44, %9 : vector<16x32xf32>
    %cst_24 = arith.constant 1.000000e+00 : f32
    %46 = vector.broadcast %cst_24 : f32 to vector<16x32xf32>
    %47 = arith.addf %46, %43 : vector<16x32xf32>
    %48 = arith.mulf %45, %47 : vector<16x32xf32>
    %49 = arith.truncf %48 : vector<16x32xf32> to vector<16x32xbf16>
    %cst_25 = arith.constant dense<0.000000e+00> : vector<16x128xf32>
    %50 = tpu.matmul %49, %1, %cst_25 {dimension_numbers = #tpu.dot_dimension_numbers<[1], [0], [0], [1], [0, 0, 1, 1], [], []>} : vector<16x32xbf16>, vector<32x128xbf16>, vector<16x128xf32> -> vector<16x128xf32>
    %51 = vector.broadcast %2 : vector<1x128xf32> to vector<16x128xf32>
    %52 = arith.addf %50, %51 : vector<16x128xf32>
    %53 = arith.truncf %52 : vector<16x128xf32> to vector<16x128xbf16>
    %c0_26 = arith.constant 0 : index
    %c0_27 = arith.constant 0 : index
    %54 = vector.load %arg6[%c0_26, %c0_27] : memref<16x512xbf16, #tpu.memory_space<vmem>>, vector<16x128xbf16>
    tpu.vector_store %arg6[%c0_26, %c0_27], %53 {strides = array<i32>} : memref<16x512xbf16, #tpu.memory_space<vmem>>, vector<16x128xbf16>,
    %c1 = arith.constant 1 : index
    %c0_28 = arith.constant 0 : index
    %c0_29 = arith.constant 0 : index
    %55 = vector.load %arg2[%c1, %c0_28, %c0_29] : memref<4x32x32xbf16, #tpu.memory_space<vmem>>, vector<1x32x32xbf16>
    %56 = vector.shape_cast %55 : vector<1x32x32xbf16> to vector<32x32xbf16>
    %cst_30 = arith.constant dense<0.000000e+00> : vector<16x32xf32>
    %57 = tpu.matmul %0, %56, %cst_30 {dimension_numbers = #tpu.dot_dimension_numbers<[1], [0], [0], [1], [0, 0, 1, 1], [], []>} : vector<16x32xbf16>, vector<32x32xbf16>, vector<16x32xf32> -> vector<16x32xf32>
    %c1_31 = arith.constant 1 : index
    %c0_32 = arith.constant 0 : index
    %c0_33 = arith.constant 0 : index
    %58 = vector.load %arg3[%c1_31, %c0_32, %c0_33] : memref<4x1x32xf32, #tpu.memory_space<vmem>>, vector<1x1x32xf32>
    %59 = vector.shape_cast %58 : vector<1x1x32xf32> to vector<1x32xf32>
    %60 = vector.broadcast %59 : vector<1x32xf32> to vector<16x32xf32>
    %61 = arith.addf %57, %60 : vector<16x32xf32>
    %cst_34 = arith.constant 0.707106769 : f32
    %62 = vector.broadcast %cst_34 : f32 to vector<16x32xf32>
    %63 = arith.mulf %61, %62 : vector<16x32xf32>
    %64 = math.absf %63 : vector<16x32xf32>
    %cst_35 = arith.constant 0.327591091 : f32
    %65 = vector.broadcast %cst_35 : f32 to vector<16x32xf32>
    %66 = arith.mulf %65, %64 : vector<16x32xf32>
    %cst_36 = arith.constant 1.000000e+00 : f32
    %67 = vector.broadcast %cst_36 : f32 to vector<16x32xf32>
    %68 = arith.addf %67, %66 : vector<16x32xf32>
    %69 = tpu.reciprocal %68 {approx = true} : vector<16x32xf32> -> vector<16x32xf32>
    %cst_37 = arith.constant 1.06140542 : f32
    %70 = vector.broadcast %cst_37 : f32 to vector<16x32xf32>
    %71 = arith.mulf %70, %69 : vector<16x32xf32>
    %cst_38 = arith.constant -1.45315206 : f32
    %72 = vector.broadcast %cst_38 : f32 to vector<16x32xf32>
    %73 = arith.addf %71, %72 : vector<16x32xf32>
    %74 = arith.mulf %73, %69 : vector<16x32xf32>
    %cst_39 = arith.constant 1.42141378 : f32
    %75 = vector.broadcast %cst_39 : f32 to vector<16x32xf32>
    %76 = arith.addf %74, %75 : vector<16x32xf32>
    %77 = arith.mulf %76, %69 : vector<16x32xf32>
    %cst_40 = arith.constant -0.284496725 : f32
    %78 = vector.broadcast %cst_40 : f32 to vector<16x32xf32>
    %79 = arith.addf %77, %78 : vector<16x32xf32>
    %80 = arith.mulf %79, %69 : vector<16x32xf32>
    %cst_41 = arith.constant 0.254829586 : f32
    %81 = vector.broadcast %cst_41 : f32 to vector<16x32xf32>
    %82 = arith.addf %80, %81 : vector<16x32xf32>
    %83 = arith.mulf %82, %69 : vector<16x32xf32>
    %cst_42 = arith.constant 0.000000e+00 : f32
    %84 = vector.broadcast %cst_42 : f32 to vector<16x32xf32>
    %85 = arith.subf %84, %64 : vector<16x32xf32>
    %86 = arith.mulf %85, %64 : vector<16x32xf32>
    %87 = math.exp %86 : vector<16x32xf32>
    %88 = arith.mulf %83, %87 : vector<16x32xf32>
    %cst_43 = arith.constant 1.000000e+00 : f32
    %89 = vector.broadcast %cst_43 : f32 to vector<16x32xf32>
    %90 = arith.subf %89, %88 : vector<16x32xf32>
    %cst_44 = arith.constant 0.000000e+00 : f32
    %91 = vector.broadcast %cst_44 : f32 to vector<16x32xf32>
    %92 = arith.cmpf oge, %63, %91 : vector<16x32xf32>
    %cst_45 = arith.constant 0.000000e+00 : f32
    %93 = vector.broadcast %cst_45 : f32 to vector<16x32xf32>
    %94 = arith.subf %93, %90 : vector<16x32xf32>
    %95 = arith.select %92, %90, %94 : vector<16x32xi1>, vector<16x32xf32>
    %cst_46 = arith.constant 5.000000e-01 : f32
    %96 = vector.broadcast %cst_46 : f32 to vector<16x32xf32>
    %97 = arith.mulf %96, %61 : vector<16x32xf32>
    %cst_47 = arith.constant 1.000000e+00 : f32
    %98 = vector.broadcast %cst_47 : f32 to vector<16x32xf32>
    %99 = arith.addf %98, %95 : vector<16x32xf32>
    %100 = arith.mulf %97, %99 : vector<16x32xf32>
    %101 = arith.truncf %100 : vector<16x32xf32> to vector<16x32xbf16>
    %cst_48 = arith.constant dense<0.000000e+00> : vector<16x128xf32>
    %102 = tpu.matmul %101, %1, %cst_48 {dimension_numbers = #tpu.dot_dimension_numbers<[1], [0], [0], [1], [0, 0, 1, 1], [], []>} : vector<16x32xbf16>, vector<32x128xbf16>, vector<16x128xf32> -> vector<16x128xf32>
    %103 = vector.broadcast %2 : vector<1x128xf32> to vector<16x128xf32>
    %104 = arith.addf %102, %103 : vector<16x128xf32>
    %105 = arith.truncf %104 : vector<16x128xf32> to vector<16x128xbf16>
    %c0_49 = arith.constant 0 : index
    %c128 = arith.constant 128 : index
    %106 = vector.load %arg6[%c0_49, %c128] : memref<16x512xbf16, #tpu.memory_space<vmem>>, vector<16x128xbf16>
    tpu.vector_store %arg6[%c0_49, %c128], %105 {strides = array<i32>} : memref<16x512xbf16, #tpu.memory_space<vmem>>, vector<16x128xbf16>,
    %c2 = arith.constant 2 : index
    %c0_50 = arith.constant 0 : index
    %c0_51 = arith.constant 0 : index
    %107 = vector.load %arg2[%c2, %c0_50, %c0_51] : memref<4x32x32xbf16, #tpu.memory_space<vmem>>, vector<1x32x32xbf16>
    %108 = vector.shape_cast %107 : vector<1x32x32xbf16> to vector<32x32xbf16>
    %cst_52 = arith.constant dense<0.000000e+00> : vector<16x32xf32>
    %109 = tpu.matmul %0, %108, %cst_52 {dimension_numbers = #tpu.dot_dimension_numbers<[1], [0], [0], [1], [0, 0, 1, 1], [], []>} : vector<16x32xbf16>, vector<32x32xbf16>, vector<16x32xf32> -> vector<16x32xf32>
    %c2_53 = arith.constant 2 : index
    %c0_54 = arith.constant 0 : index
    %c0_55 = arith.constant 0 : index
    %110 = vector.load %arg3[%c2_53, %c0_54, %c0_55] : memref<4x1x32xf32, #tpu.memory_space<vmem>>, vector<1x1x32xf32>
    %111 = vector.shape_cast %110 : vector<1x1x32xf32> to vector<1x32xf32>
    %112 = vector.broadcast %111 : vector<1x32xf32> to vector<16x32xf32>
    %113 = arith.addf %109, %112 : vector<16x32xf32>
    %cst_56 = arith.constant 0.707106769 : f32
    %114 = vector.broadcast %cst_56 : f32 to vector<16x32xf32>
    %115 = arith.mulf %113, %114 : vector<16x32xf32>
    %116 = math.absf %115 : vector<16x32xf32>
    %cst_57 = arith.constant 0.327591091 : f32
    %117 = vector.broadcast %cst_57 : f32 to vector<16x32xf32>
    %118 = arith.mulf %117, %116 : vector<16x32xf32>
    %cst_58 = arith.constant 1.000000e+00 : f32
    %119 = vector.broadcast %cst_58 : f32 to vector<16x32xf32>
    %120 = arith.addf %119, %118 : vector<16x32xf32>
    %121 = tpu.reciprocal %120 {approx = true} : vector<16x32xf32> -> vector<16x32xf32>
    %cst_59 = arith.constant 1.06140542 : f32
    %122 = vector.broadcast %cst_59 : f32 to vector<16x32xf32>
    %123 = arith.mulf %122, %121 : vector<16x32xf32>
    %cst_60 = arith.constant -1.45315206 : f32
    %124 = vector.broadcast %cst_60 : f32 to vector<16x32xf32>
    %125 = arith.addf %123, %124 : vector<16x32xf32>
    %126 = arith.mulf %125, %121 : vector<16x32xf32>
    %cst_61 = arith.constant 1.42141378 : f32
    %127 = vector.broadcast %cst_61 : f32 to vector<16x32xf32>
    %128 = arith.addf %126, %127 : vector<16x32xf32>
    %129 = arith.mulf %128, %121 : vector<16x32xf32>
    %cst_62 = arith.constant -0.284496725 : f32
    %130 = vector.broadcast %cst_62 : f32 to vector<16x32xf32>
    %131 = arith.addf %129, %130 : vector<16x32xf32>
    %132 = arith.mulf %131, %121 : vector<16x32xf32>
    %cst_63 = arith.constant 0.254829586 : f32
    %133 = vector.broadcast %cst_63 : f32 to vector<16x32xf32>
    %134 = arith.addf %132, %133 : vector<16x32xf32>
    %135 = arith.mulf %134, %121 : vector<16x32xf32>
    %cst_64 = arith.constant 0.000000e+00 : f32
    %136 = vector.broadcast %cst_64 : f32 to vector<16x32xf32>
    %137 = arith.subf %136, %116 : vector<16x32xf32>
    %138 = arith.mulf %137, %116 : vector<16x32xf32>
    %139 = math.exp %138 : vector<16x32xf32>
    %140 = arith.mulf %135, %139 : vector<16x32xf32>
    %cst_65 = arith.constant 1.000000e+00 : f32
    %141 = vector.broadcast %cst_65 : f32 to vector<16x32xf32>
    %142 = arith.subf %141, %140 : vector<16x32xf32>
    %cst_66 = arith.constant 0.000000e+00 : f32
    %143 = vector.broadcast %cst_66 : f32 to vector<16x32xf32>
    %144 = arith.cmpf oge, %115, %143 : vector<16x32xf32>
    %cst_67 = arith.constant 0.000000e+00 : f32
    %145 = vector.broadcast %cst_67 : f32 to vector<16x32xf32>
    %146 = arith.subf %145, %142 : vector<16x32xf32>
    %147 = arith.select %144, %142, %146 : vector<16x32xi1>, vector<16x32xf32>
    %cst_68 = arith.constant 5.000000e-01 : f32
    %148 = vector.broadcast %cst_68 : f32 to vector<16x32xf32>
    %149 = arith.mulf %148, %113 : vector<16x32xf32>
    %cst_69 = arith.constant 1.000000e+00 : f32
    %150 = vector.broadcast %cst_69 : f32 to vector<16x32xf32>
    %151 = arith.addf %150, %147 : vector<16x32xf32>
    %152 = arith.mulf %149, %151 : vector<16x32xf32>
    %153 = arith.truncf %152 : vector<16x32xf32> to vector<16x32xbf16>
    %cst_70 = arith.constant dense<0.000000e+00> : vector<16x128xf32>
    %154 = tpu.matmul %153, %1, %cst_70 {dimension_numbers = #tpu.dot_dimension_numbers<[1], [0], [0], [1], [0, 0, 1, 1], [], []>} : vector<16x32xbf16>, vector<32x128xbf16>, vector<16x128xf32> -> vector<16x128xf32>
    %155 = vector.broadcast %2 : vector<1x128xf32> to vector<16x128xf32>
    %156 = arith.addf %154, %155 : vector<16x128xf32>
    %157 = arith.truncf %156 : vector<16x128xf32> to vector<16x128xbf16>
    %c0_71 = arith.constant 0 : index
    %c256 = arith.constant 256 : index
    %158 = vector.load %arg6[%c0_71, %c256] : memref<16x512xbf16, #tpu.memory_space<vmem>>, vector<16x128xbf16>
    tpu.vector_store %arg6[%c0_71, %c256], %157 {strides = array<i32>} : memref<16x512xbf16, #tpu.memory_space<vmem>>, vector<16x128xbf16>,
    %c3 = arith.constant 3 : index
    %c0_72 = arith.constant 0 : index
    %c0_73 = arith.constant 0 : index
    %159 = vector.load %arg2[%c3, %c0_72, %c0_73] : memref<4x32x32xbf16, #tpu.memory_space<vmem>>, vector<1x32x32xbf16>
    %160 = vector.shape_cast %159 : vector<1x32x32xbf16> to vector<32x32xbf16>
    %cst_74 = arith.constant dense<0.000000e+00> : vector<16x32xf32>
    %161 = tpu.matmul %0, %160, %cst_74 {dimension_numbers = #tpu.dot_dimension_numbers<[1], [0], [0], [1], [0, 0, 1, 1], [], []>} : vector<16x32xbf16>, vector<32x32xbf16>, vector<16x32xf32> -> vector<16x32xf32>
    %c3_75 = arith.constant 3 : index
    %c0_76 = arith.constant 0 : index
    %c0_77 = arith.constant 0 : index
    %162 = vector.load %arg3[%c3_75, %c0_76, %c0_77] : memref<4x1x32xf32, #tpu.memory_space<vmem>>, vector<1x1x32xf32>
    %163 = vector.shape_cast %162 : vector<1x1x32xf32> to vector<1x32xf32>
    %164 = vector.broadcast %163 : vector<1x32xf32> to vector<16x32xf32>
    %165 = arith.addf %161, %164 : vector<16x32xf32>
    %cst_78 = arith.constant 0.707106769 : f32
    %166 = vector.broadcast %cst_78 : f32 to vector<16x32xf32>
    %167 = arith.mulf %165, %166 : vector<16x32xf32>
    %168 = math.absf %167 : vector<16x32xf32>
    %cst_79 = arith.constant 0.327591091 : f32
    %169 = vector.broadcast %cst_79 : f32 to vector<16x32xf32>
    %170 = arith.mulf %169, %168 : vector<16x32xf32>
    %cst_80 = arith.constant 1.000000e+00 : f32
    %171 = vector.broadcast %cst_80 : f32 to vector<16x32xf32>
    %172 = arith.addf %171, %170 : vector<16x32xf32>
    %173 = tpu.reciprocal %172 {approx = true} : vector<16x32xf32> -> vector<16x32xf32>
    %cst_81 = arith.constant 1.06140542 : f32
    %174 = vector.broadcast %cst_81 : f32 to vector<16x32xf32>
    %175 = arith.mulf %174, %173 : vector<16x32xf32>
    %cst_82 = arith.constant -1.45315206 : f32
    %176 = vector.broadcast %cst_82 : f32 to vector<16x32xf32>
    %177 = arith.addf %175, %176 : vector<16x32xf32>
    %178 = arith.mulf %177, %173 : vector<16x32xf32>
    %cst_83 = arith.constant 1.42141378 : f32
    %179 = vector.broadcast %cst_83 : f32 to vector<16x32xf32>
    %180 = arith.addf %178, %179 : vector<16x32xf32>
    %181 = arith.mulf %180, %173 : vector<16x32xf32>
    %cst_84 = arith.constant -0.284496725 : f32
    %182 = vector.broadcast %cst_84 : f32 to vector<16x32xf32>
    %183 = arith.addf %181, %182 : vector<16x32xf32>
    %184 = arith.mulf %183, %173 : vector<16x32xf32>
    %cst_85 = arith.constant 0.254829586 : f32
    %185 = vector.broadcast %cst_85 : f32 to vector<16x32xf32>
    %186 = arith.addf %184, %185 : vector<16x32xf32>
    %187 = arith.mulf %186, %173 : vector<16x32xf32>
    %cst_86 = arith.constant 0.000000e+00 : f32
    %188 = vector.broadcast %cst_86 : f32 to vector<16x32xf32>
    %189 = arith.subf %188, %168 : vector<16x32xf32>
    %190 = arith.mulf %189, %168 : vector<16x32xf32>
    %191 = math.exp %190 : vector<16x32xf32>
    %192 = arith.mulf %187, %191 : vector<16x32xf32>
    %cst_87 = arith.constant 1.000000e+00 : f32
    %193 = vector.broadcast %cst_87 : f32 to vector<16x32xf32>
    %194 = arith.subf %193, %192 : vector<16x32xf32>
    %cst_88 = arith.constant 0.000000e+00 : f32
    %195 = vector.broadcast %cst_88 : f32 to vector<16x32xf32>
    %196 = arith.cmpf oge, %167, %195 : vector<16x32xf32>
    %cst_89 = arith.constant 0.000000e+00 : f32
    %197 = vector.broadcast %cst_89 : f32 to vector<16x32xf32>
    %198 = arith.subf %197, %194 : vector<16x32xf32>
    %199 = arith.select %196, %194, %198 : vector<16x32xi1>, vector<16x32xf32>
    %cst_90 = arith.constant 5.000000e-01 : f32
    %200 = vector.broadcast %cst_90 : f32 to vector<16x32xf32>
    %201 = arith.mulf %200, %165 : vector<16x32xf32>
    %cst_91 = arith.constant 1.000000e+00 : f32
    %202 = vector.broadcast %cst_91 : f32 to vector<16x32xf32>
    %203 = arith.addf %202, %199 : vector<16x32xf32>
    %204 = arith.mulf %201, %203 : vector<16x32xf32>
    %205 = arith.truncf %204 : vector<16x32xf32> to vector<16x32xbf16>
    %cst_92 = arith.constant dense<0.000000e+00> : vector<16x128xf32>
    %206 = tpu.matmul %205, %1, %cst_92 {dimension_numbers = #tpu.dot_dimension_numbers<[1], [0], [0], [1], [0, 0, 1, 1], [], []>} : vector<16x32xbf16>, vector<32x128xbf16>, vector<16x128xf32> -> vector<16x128xf32>
    %207 = vector.broadcast %2 : vector<1x128xf32> to vector<16x128xf32>
    %208 = arith.addf %206, %207 : vector<16x128xf32>
    %209 = arith.truncf %208 : vector<16x128xf32> to vector<16x128xbf16>
    %c0_93 = arith.constant 0 : index
    %c384 = arith.constant 384 : index
    %210 = vector.load %arg6[%c0_93, %c384] : memref<16x512xbf16, #tpu.memory_space<vmem>>, vector<16x128xbf16>
    tpu.vector_store %arg6[%c0_93, %c384], %209 {strides = array<i32>} : memref<16x512xbf16, #tpu.memory_space<vmem>>, vector<16x128xbf16>,
    return
  }
  func.func @transform_0(%arg0: i32) -> (i32, i32) {
    %c0_i32 = arith.constant 0 : i32
    %c0_i32_0 = arith.constant 0 : i32
    return %arg0, %c0_i32 : i32, i32
  }
  func.func @transform_1(%arg0: i32) -> (i32, i32, i32) {
    %c0_i32 = arith.constant 0 : i32
    %c0_i32_0 = arith.constant 0 : i32
    %c0_i32_1 = arith.constant 0 : i32
    %c0_i32_2 = arith.constant 0 : i32
    return %c0_i32, %c0_i32_0, %c0_i32_1 : i32, i32, i32
  }
  func.func @transform_2(%arg0: i32) -> (i32, i32, i32) {
    %c0_i32 = arith.constant 0 : i32
    %c0_i32_0 = arith.constant 0 : i32
    %c0_i32_1 = arith.constant 0 : i32
    %c0_i32_2 = arith.constant 0 : i32
    return %c0_i32, %c0_i32_0, %c0_i32_1 : i32, i32, i32
  }
  func.func @transform_3(%arg0: i32) -> (i32, i32) {
    %c0_i32 = arith.constant 0 : i32
    %c0_i32_0 = arith.constant 0 : i32
    %c0_i32_1 = arith.constant 0 : i32
    return %c0_i32, %c0_i32_0 : i32, i32
  }
  func.func @transform_4(%arg0: i32) -> (i32, i32) {
    %c0_i32 = arith.constant 0 : i32
    %c0_i32_0 = arith.constant 0 : i32
    %c0_i32_1 = arith.constant 0 : i32
    return %c0_i32, %c0_i32_0 : i32, i32
  }
  func.func @transform_5(%arg0: i32) -> (i32, i32) {
    %c0_i32 = arith.constant 0 : i32
    %c0_i32_0 = arith.constant 0 : i32
    return %arg0, %c0_i32 : i32, i32
  }
}

</mosaic_0001>

<llo_original>
// kernel: tpu_custom_call.1
$region0: #{tpu_custom_call.1}
  #allocation0 [shape = 'u32[]', space=smem, size = 0x4, offset = 0x4, fixed_abs, tag = 'smem constant byte address 0x4 - core index']
  #allocation1 [shape = 'u32[72,128]{1,0:T(1,128)}', space=vmem, size = 0x9000, scoped, tag = 'internal scratch']
  %s0 = inlined_call_operand.hbm [shape: bf16[32,32], index: 0, kind: input, shape index: {}]
  %s1 = inlined_call_operand.hbm [shape: bf16[4,32,32], index: 1, kind: input, shape index: {}]
  %s2 = inlined_call_operand.hbm [shape: f32[4,1,32], index: 2, kind: input, shape index: {}]
  %s3 = inlined_call_operand.hbm [shape: bf16[32,128], index: 3, kind: input, shape index: {}]
  %s4 = inlined_call_operand.vmem [shape: f32[1,128], index: 4, kind: input, shape index: {}]
  %s5 = inlined_call_operand.hbm [shape: bf16[32,512], index: 5, kind: output, shape index: {}]
  %s6 = sld [smem:[#allocation0]]
  $region69: #{tpu_custom_call.1} parent=0
    _
  %s8 = ssub.s32 1, %s6
  %s9 = scalar_select 0, %s8, %s6
  $region1: #{tpu_custom_call.1} parent=0
    #allocation2 [shape = 'u8[8192]{0}', space=vmem, size = 0x2000, scoped, tag = 'input window, operand 0']
    #allocation3 [shape = 's32[2]{0}', space=sflag, size = 0x8, scoped, tag = 'scoped memory for tpu_custom_call.1']
    #allocation4 [shape = 's32[2]{0}', space=sflag, size = 0x8, scoped, tag = 'scoped memory for tpu_custom_call.1']
    #allocation5 [shape = 'u8[32768]{0}', space=vmem, size = 0x8000, scoped, tag = 'input window, operand 1, single buffered']
    #allocation6 [shape = 's32[1]{0}', space=sflag, size = 0x4, scoped, tag = 'scoped memory for tpu_custom_call.1']
    #allocation7 [shape = 'u8[2048]{0}', space=vmem, size = 0x800, scoped, tag = 'input window, operand 2, single buffered']
    #allocation8 [shape = 'u8[8192]{0}', space=vmem, size = 0x2000, scoped, tag = 'input window, operand 3, single buffered']
    #allocation9 [shape = 's32[1]{0}', space=sflag, size = 0x4, scoped, tag = 'scoped memory for tpu_custom_call.1']
    #allocation10 [shape = 'u8[32768]{0}', space=vmem, size = 0x8000, scoped, tag = 'output window, operand 0']
    %10 = vsyncpa [#allocation3], 0
    %s11 = scalar_lea.sflag [#allocation3], 1
    %12 = vsyncpa %s11, 0
    %13 = vsyncpa [#allocation6], 0
    %14 = vsyncpa [#allocation9], 0
    %15 = vsyncpa [#allocation4], 0
    %s16 = scalar_lea.sflag [#allocation4], 1
    %17 = vsyncpa %s16, 0
    loop: start=0, step=1, limit=4
    $region2: #{tpu_custom_call.1} parent=1 // loop_pre_header
      _
    $region3: #{tpu_custom_call.1} parent=1 // loop_header
      %s19 = sphi 0, %s23
      %p20 = scmp.ge.s32.totalorder %s19, 4
      %s29 = sphi 0, %s31
      %s32 = sphi 0, %s29
      %s33 = sphi 0, %s32
      %s49 = sphi 0, %s33
      %s53 = sphi 0, %s53
      %s55 = sphi 0, %s53
      %s56 = sphi 0, %s55
      %s70 = sphi 0, %s56
      %s74 = sphi 0, %s74
      %s76 = sphi 0, %s74
      %s77 = sphi 0, %s76
      %s91 = sphi 0, %s77
      %s95 = sphi 0, %s95
      %s97 = sphi 0, %s95
      %s98 = sphi 0, %s97
      %s112 = sphi 0, %s98
      %s116 = sphi 0, %s116
      %s118 = sphi 0, %s116
      %s119 = sphi 0, %s118
      %s133 = sphi 0, %s119
      %s139 = sphi 0, %s141
      %s142 = sphi 0, %s139
      %s143 = sphi 0, %s142
      %s159 = sphi 0, %s143
    $region4: #{tpu_custom_call.1} parent=1 // loop_header_branch
      %22 = sbr.rel (%p20) target = $region8
    $region5: #{tpu_custom_call.1} parent=1 // loop_body
      %s24 = ssub.s32 %s19, 1
      %s25 = ssub.s32 %s19, 2
      %s26 = sadd.s32 %s19, 1
      %s27 = ssub.s32 %s19, %s26
      %p28 = scmp.eq.s32.totalorder %s27, 0
      %s30 = sadd.s32 %s29, 1
      %s31 = scalar_select %p28, %s29, %s30
      %p34 = pneg %p28
      %p35 = scmp.eq.s32.totalorder %s19, 1
      %p36 = por %p34, %p35
      %p37 = scmp.ne.s32.totalorder %s29, %s32
      %p38 = scmp.eq.s32.totalorder %s19, 0
      %p39 = por %p37, %p38
      %p40 = scmp.ne.s32.totalorder %s29, %s32
      %p41 = scmp.eq.s32.totalorder %s24, 1
      %p42 = por %p40, %p41
      %p43 = scmp.ne.s32.totalorder %s32, %s33
      %p44 = scmp.eq.s32.totalorder %s24, 0
      %p45 = por %p43, %p44
      %p46 = scmp.ne.s32.totalorder %s32, %s33
      %p47 = scmp.eq.s32.totalorder %s25, 1
      %p48 = por %p46, %p47
      %p50 = scmp.ne.s32.totalorder %s33, %s49
      %p51 = scmp.eq.s32.totalorder %s25, 0
      %p52 = por %p50, %p51
      %s54 = sadd.s32 %s53, 1
      %p57 = scmp.eq.s32.totalorder %s19, 1
      %p58 = scmp.ne.s32.totalorder %s53, %s55
      %p59 = scmp.eq.s32.totalorder %s19, 0
      %p60 = por %p58, %p59
      %p61 = scmp.ne.s32.totalorder %s53, %s55
      %p62 = scmp.eq.s32.totalorder %s24, 1
      %p63 = por %p61, %p62
      %p64 = scmp.ne.s32.totalorder %s55, %s56
      %p65 = scmp.eq.s32.totalorder %s24, 0
      %p66 = por %p64, %p65
      %p67 = scmp.ne.s32.totalorder %s55, %s56
      %p68 = scmp.eq.s32.totalorder %s25, 1
      %p69 = por %p67, %p68
      %p71 = scmp.ne.s32.totalorder %s56, %s70
      %p72 = scmp.eq.s32.totalorder %s25, 0
      %p73 = por %p71, %p72
      %s75 = sadd.s32 %s74, 1
      %p78 = scmp.eq.s32.totalorder %s19, 1
      %p79 = scmp.ne.s32.totalorder %s74, %s76
      %p80 = scmp.eq.s32.totalorder %s19, 0
      %p81 = por %p79, %p80
      %p82 = scmp.ne.s32.totalorder %s74, %s76
      %p83 = scmp.eq.s32.totalorder %s24, 1
      %p84 = por %p82, %p83
      %p85 = scmp.ne.s32.totalorder %s76, %s77
      %p86 = scmp.eq.s32.totalorder %s24, 0
      %p87 = por %p85, %p86
      %p88 = scmp.ne.s32.totalorder %s76, %s77
      %p89 = scmp.eq.s32.totalorder %s25, 1
      %p90 = por %p88, %p89
      %p92 = scmp.ne.s32.totalorder %s77, %s91
      %p93 = scmp.eq.s32.totalorder %s25, 0
      %p94 = por %p92, %p93
      %s96 = sadd.s32 %s95, 1
      %p99 = scmp.eq.s32.totalorder %s19, 1
      %p100 = scmp.ne.s32.totalorder %s95, %s97
      %p101 = scmp.eq.s32.totalorder %s19, 0
      %p102 = por %p100, %p101
      %p103 = scmp.ne.s32.totalorder %s95, %s97
      %p104 = scmp.eq.s32.totalorder %s24, 1
      %p105 = por %p103, %p104
      %p106 = scmp.ne.s32.totalorder %s97, %s98
      %p107 = scmp.eq.s32.totalorder %s24, 0
      %p108 = por %p106, %p107
      %p109 = scmp.ne.s32.totalorder %s97, %s98
      %p110 = scmp.eq.s32.totalorder %s25, 1
      %p111 = por %p109, %p110
      %p113 = scmp.ne.s32.totalorder %s98, %s112
      %p114 = scmp.eq.s32.totalorder %s25, 0
      %p115 = por %p113, %p114
      %s117 = sadd.s32 %s116, 1
      %p120 = scmp.eq.s32.totalorder %s19, 1
      %p121 = scmp.ne.s32.totalorder %s116, %s118
      %p122 = scmp.eq.s32.totalorder %s19, 0
      %p123 = por %p121, %p122
      %p124 = scmp.ne.s32.totalorder %s116, %s118
      %p125 = scmp.eq.s32.totalorder %s24, 1
      %p126 = por %p124, %p125
      %p127 = scmp.ne.s32.totalorder %s118, %s119
      %p128 = scmp.eq.s32.totalorder %s24, 0
      %p129 = por %p127, %p128
      %p130 = scmp.ne.s32.totalorder %s118, %s119
      %p131 = scmp.eq.s32.totalorder %s25, 1
      %p132 = por %p130, %p131
      %p134 = scmp.ne.s32.totalorder %s119, %s133
      %p135 = scmp.eq.s32.totalorder %s25, 0
      %p136 = por %p134, %p135
      %s137 = ssub.s32 %s19, %s26
      %p138 = scmp.eq.s32.totalorder %s137, 0
      %s140 = sadd.s32 %s139, 1
      %s141 = scalar_select %p138, %s139, %s140
      %p144 = pneg %p138
      %p145 = scmp.eq.s32.totalorder %s19, 1
      %p146 = por %p144, %p145
      %p147 = scmp.ne.s32.totalorder %s139, %s142
      %p148 = scmp.eq.s32.totalorder %s19, 0
      %p149 = por %p147, %p148
      %p150 = scmp.ne.s32.totalorder %s139, %s142
      %p151 = scmp.eq.s32.totalorder %s24, 1
      %p152 = por %p150, %p151
      %p153 = scmp.ne.s32.totalorder %s142, %s143
      %p154 = scmp.eq.s32.totalorder %s24, 0
      %p155 = por %p153, %p154
      %p156 = scmp.ne.s32.totalorder %s142, %s143
      %p157 = scmp.eq.s32.totalorder %s25, 1
      %p158 = por %p156, %p157
      %p160 = scmp.ne.s32.totalorder %s143, %s159
      %p161 = scmp.eq.s32.totalorder %s25, 0
      %p162 = por %p160, %p161
      %p163 = scmp.le.s32.totalorder 1, %s19
      %p164 = scmp.lt.s32.totalorder %s19, 3
      %p165 = pnand %p163, %p164
      %p166 = pneg %p165
      // Predicated region
      $region9: #{tpu_custom_call.1} parent=5 // pred_check
        _
      $region10: #{tpu_custom_call.1} parent=5 // pred_check_branch
        %168 = sbr.rel (%p165) target = $region12
      $region11: #{tpu_custom_call.1} parent=5 // pred_region
        %s169 = ssub.s32 %s19, 1
        // Predicated region
        $region13: #{tpu_custom_call.1} parent=11 // pred_check
          %p170 = pneg %p66
        $region14: #{tpu_custom_call.1} parent=11 // pred_check_branch
          %172 = sbr.rel (%p170) target = $region16
        $region15: #{tpu_custom_call.1} parent=11 // pred_region
          %174 = vsyncadd [#allocation6], 0
          %s175 = sshll.u32 %s1, 4
          %s176 = int_to_ptr.hbm [resolvable:$true] %s175
          %s177 = sshll.u32 [#allocation5], 4
          %s178 = int_to_ptr.vmem [resolvable:$true] %s177
          %183 = dma.hbm_to_vmem [thread:$0]  %s176, 1024, %s178, [#allocation6], 64, 64, 4
        $region16: #{tpu_custom_call.1} parent=11 // pred_fallthru
          _
        // Predicated region
        $region17: #{tpu_custom_call.1} parent=11 // pred_check
          %p184 = pneg %p87
        $region18: #{tpu_custom_call.1} parent=11 // pred_check_branch
          %186 = sbr.rel (%p184) target = $region20
        $region19: #{tpu_custom_call.1} parent=11 // pred_region
          %188 = vsyncadd [#allocation6], 0
          %s189 = sshll.u32 %s2, 4
          %s190 = int_to_ptr.hbm [resolvable:$true] %s189
          %s191 = sshll.u32 [#allocation7], 4
          %s192 = int_to_ptr.vmem [resolvable:$true] %s191
          %197 = dma.hbm_to_vmem [thread:$0]  %s190, 64, %s192, [#allocation6], 16, 16, 1
        $region20: #{tpu_custom_call.1} parent=11 // pred_fallthru
          _
        // Predicated region
        $region21: #{tpu_custom_call.1} parent=11 // pred_check
          %p198 = pneg %p108
        $region22: #{tpu_custom_call.1} parent=11 // pred_check_branch
          %200 = sbr.rel (%p198) target = $region24
        $region23: #{tpu_custom_call.1} parent=11 // pred_region
          %202 = vsyncadd [#allocation9], 0
          %s203 = sshll.u32 %s3, 4
          %s204 = int_to_ptr.hbm [resolvable:$true] %s203
          %s205 = sshll.u32 [#allocation8], 4
          %s206 = int_to_ptr.vmem [resolvable:$true] %s205
          %211 = dma.hbm_to_vmem [thread:$0]  %s204, 256, %s206, [#allocation9], 64, 64, 4
        $region24: #{tpu_custom_call.1} parent=11 // pred_fallthru
          _
        // Predicated region
        $region25: #{tpu_custom_call.1} parent=11 // pred_check
          %p212 = pneg %p129
        $region26: #{tpu_custom_call.1} parent=11 // pred_check_branch
          %214 = sbr.rel (%p212) target = $region28
        $region27: #{tpu_custom_call.1} parent=11 // pred_region
          _
        $region28: #{tpu_custom_call.1} parent=11 // pred_fallthru
          _
      $region12: #{tpu_custom_call.1} parent=5 // pred_fallthru
        _
      %p215 = scmp.lt.s32.totalorder %s19, 2
      // Predicated region
      $region29: #{tpu_custom_call.1} parent=5 // pred_check
        %p216 = pneg %p215
      $region30: #{tpu_custom_call.1} parent=5 // pred_check_branch
        %218 = sbr.rel (%p216) target = $region32
      $region31: #{tpu_custom_call.1} parent=5 // pred_region
        // Predicated region
        $region33: #{tpu_custom_call.1} parent=31 // pred_check
          %p219 = pneg %p39
        $region34: #{tpu_custom_call.1} parent=31 // pred_check_branch
          %221 = sbr.rel (%p219) target = $region36
        $region35: #{tpu_custom_call.1} parent=31 // pred_region
          %s222 = sand.u32 %s29, 1
          %s223 = scalar_lea.sflag [#allocation3], %s222
          %s224 = sand.u32 %s29, 1
          %s225 = smul.addr %s224, 8
          %s226 = scalar_lea.vmem [#allocation2], %s225
          %s227 = smul.u32 2, %s19
          %229 = vsyncadd %s223, 0
          %s230 = smul.addr %s227, 4
          %s231 = scalar_lea.hbm %s0, %s230
          %s232 = sshll.u32 %s231, 4
          %s233 = int_to_ptr.hbm [resolvable:$true] %s232
          %s234 = sshll.u32 %s226, 4
          %s235 = int_to_ptr.vmem [resolvable:$true] %s234
          %240 = dma.hbm_to_vmem [thread:$0]  %s233, 128, %s235, %s223, 64, 64, 4
        $region36: #{tpu_custom_call.1} parent=31 // pred_fallthru
          _
      $region32: #{tpu_custom_call.1} parent=5 // pred_fallthru
        _
      %p241 = scmp.le.s32.totalorder 1, %s19
      %p242 = scmp.lt.s32.totalorder %s19, 3
      %p243 = pnand %p241, %p242
      %p244 = pneg %p243
      // Predicated region
      $region37: #{tpu_custom_call.1} parent=5 // pred_check
        _
      $region38: #{tpu_custom_call.1} parent=5 // pred_check_branch
        %246 = sbr.rel (%p243) target = $region40
      $region39: #{tpu_custom_call.1} parent=5 // pred_region
        %s247 = ssub.s32 %s19, 1
        %s248 = sand.u32 %s32, 1
        %s249 = scalar_lea.sflag [#allocation3], %s248
        %s250 = sand.u32 %s32, 1
        %s251 = smul.addr %s250, 8
        %s252 = scalar_lea.vmem [#allocation2], %s251
        // Predicated region
        $region41: #{tpu_custom_call.1} parent=39 // pred_check
          %p253 = pneg %p45
        $region42: #{tpu_custom_call.1} parent=39 // pred_check_branch
          %255 = sbr.rel (%p253) target = $region44
        $region43: #{tpu_custom_call.1} parent=39 // pred_region
          %257 = dma.done %s249, 128
        $region44: #{tpu_custom_call.1} parent=39 // pred_fallthru
          _
        // Predicated region
        $region45: #{tpu_custom_call.1} parent=39 // pred_check
          %p258 = pneg %p66
        $region46: #{tpu_custom_call.1} parent=39 // pred_check_branch
          %260 = sbr.rel (%p258) target = $region48
        $region47: #{tpu_custom_call.1} parent=39 // pred_region
          %262 = dma.done [#allocation6], 1024
        $region48: #{tpu_custom_call.1} parent=39 // pred_fallthru
          _
        // Predicated region
        $region49: #{tpu_custom_call.1} parent=39 // pred_check
          %p263 = pneg %p87
        $region50: #{tpu_custom_call.1} parent=39 // pred_check_branch
          %265 = sbr.rel (%p263) target = $region52
        $region51: #{tpu_custom_call.1} parent=39 // pred_region
          %267 = dma.done [#allocation6], 64
        $region52: #{tpu_custom_call.1} parent=39 // pred_fallthru
          _
        // Predicated region
        $region53: #{tpu_custom_call.1} parent=39 // pred_check
          %p268 = pneg %p108
        $region54: #{tpu_custom_call.1} parent=39 // pred_check_branch
          %270 = sbr.rel (%p268) target = $region56
        $region55: #{tpu_custom_call.1} parent=39 // pred_region
          %272 = dma.done [#allocation9], 256
        $region56: #{tpu_custom_call.1} parent=39 // pred_fallthru
          _
        %s273 = sand.u32 %s32, 1
        %s274 = scalar_lea.sflag [#allocation3], %s273
        %s275 = sand.u32 %s32, 1
        %s276 = smul.addr %s275, 8
        %s277 = scalar_lea.vmem [#allocation2], %s276
        %p278 = pneg %p45
        %p279 = pneg %p42
        %p280 = pneg %p66
        %p281 = pneg %p63
        %p282 = pneg %p87
        %p283 = pneg %p84
        %p284 = pneg %p108
        %p285 = pneg %p105
        %p286 = pneg %p129
        %p287 = pneg %p126
        %p288 = pneg %p155
        %p289 = pneg %p152
        %s290 = sand.u32 %s142, 1
        %s291 = scalar_lea.sflag [#allocation4], %s290
        %s292 = sand.u32 %s142, 1
        %s293 = smul.addr %s292, 32
        %s294 = scalar_lea.vmem [#allocation10], %s293
        %s295 = smul.u32 2, %s24
        %s296 = smul.u32 2, %s24
        %v298 = vld [vmem:[%s252] sm:$0xf]
        %v299 = vld [vmem:[%s252 + $0x4] sm:$0xf]
        %v300 = vld [vmem:[#allocation8] sm:$0xf]
        %v301 = vld [vmem:[#allocation8 + $0x4] sm:$0xf]
        %v302 = vld [vmem:[#allocation8 + $0x8] sm:$0xf]
        %v303 = vld [vmem:[#allocation8 + $0xc] sm:$0xf]
        %v304 = vld [vmem:[%s4] sm:$0x1]
        %v305 = vld [vmem:[#allocation5] sm:$0xf]
        %v306 = vld [vmem:[#allocation5 + $0x4] sm:$0xf]
        %v307 = vld [vmem:[#allocation5 + $0x8] sm:$0xf]
        %v308 = vld [vmem:[#allocation5 + $0xc] sm:$0xf]
        %v309 = vld [vmem:[#allocation7] sm:$0x1]
        %v311 = vperm.slane %v309, 0
        %v315 = vunpack.c.l.b16 %v298
        %v316 = vunpack.c.l.b16 %v299
        %v317 = vpack.c.b16 %v316, %v315
        %v322 = vunpack.c.l.b16 %v305
        %v323 = vunpack.c.l.b16 %v306
        %v324 = vunpack.c.l.b16 %v307
        %v325 = vunpack.c.l.b16 %v308
        %v326 = vpack.c.b16 %v323, %v322
        %v327 = vpack.c.b16 %v325, %v324
        %vm330 = vcmask 261120
        %v332 = vsel %vm330, %v317, 0
        %334 = vmatpush.bf16.msra.mxu0 0
        %335 = vmatpush.bf16.msra.mxu0 0
        %336 = vmatpush.bf16.msra.mxu0 0
        %337 = vmatpush.bf16.msra.mxu0 0
        %338 = vmatpush.bf16.msra.mxu0 0
        %339 = vmatpush.bf16.msra.mxu0 0
        %340 = vmatpush.bf16.msra.mxu0 %v327
        %341 = vmatpush.bf16.msra.mxu0 %v326
        %342 = vmatmul.bf16.gmra.mxu0 %v332
        %v343 = vpop.f32.mrf.mxu0
        %v344 = vadd.f32 %v311, %v343
        %v345 = vpop.f32.mrf.mxu0
        %v346 = vadd.f32 %v311, %v345
        %347 = vdwg.mxu0
        %v348 = vmul.f32 %v344, 0.70710677
        %v349 = vmul.f32 %v346, 0.70710677
        %v350 = vand.u32 2147483647, %v348
        %v351 = vand.u32 2147483647, %v349
        %v352 = vmul.f32 %v350, 0.3275911
        %v353 = vmul.f32 %v351, 0.3275911
        %v354 = vadd.f32 %v352, 1.0
        %v355 = vadd.f32 %v353, 1.0
        %v356 = vrcp.pop %v354
        %v357 = vrcp.pop %v355
        %v358 = vmul.f32 %v356, 1.0614054
        %v359 = vmul.f32 %v357, 1.0614054
        %v360 = vadd.f32 %v358, -1.4531521
        %v361 = vadd.f32 %v359, -1.4531521
        %v362 = vmul.f32 %v360, %v356
        %v363 = vmul.f32 %v361, %v357
        %v364 = vadd.f32 %v362, 1.4214138
        %v365 = vadd.f32 %v363, 1.4214138
        %v366 = vmul.f32 %v364, %v356
        %v367 = vmul.f32 %v365, %v357
        %v368 = vadd.f32 %v366, -0.28449672
        %v369 = vadd.f32 %v367, -0.28449672
        %v370 = vmul.f32 %v368, %v356
        %v371 = vmul.f32 %v369, %v357
        %v372 = vadd.f32 %v370, 0.2548296
        %v373 = vadd.f32 %v371, 0.2548296
        %v374 = vmul.f32 %v372, %v356
        %v375 = vmul.f32 %v373, %v357
        %v376 = vsub.f32 0.0, %v350
        %v377 = vsub.f32 0.0, %v351
        %v378 = vmul.f32 %v376, %v350
        %v379 = vmul.f32 %v377, %v351
        %v380 = vmul.f32 %v378, 1.442695
        %v381 = vpow.pop %v380
        %v382 = vmul.f32 %v379, 1.442695
        %v383 = vpow.pop %v382
        %v384 = vmul.f32 %v374, %v381
        %v385 = vmul.f32 %v375, %v383
        %v386 = vsub.f32 1.0, %v384
        %v387 = vsub.f32 1.0, %v385
        %vm388 = vcmp.ge.f32.partialorder %v348, 0.0
        %vm389 = vcmp.ge.f32.partialorder %v349, 0.0
        %v390 = vsub.f32 0.0, %v386
        %v391 = vsub.f32 0.0, %v387
        %v392 = vsel %vm388, %v386, %v390
        %v393 = vsel %vm389, %v387, %v391
        %v394 = vmul.f32 %v344, 0.5
        %v395 = vmul.f32 %v346, 0.5
        %v396 = vadd.f32 %v392, 1.0
        %v397 = vadd.f32 %v393, 1.0
        %v398 = vmul.f32 %v394, %v396
        %v399 = vmul.f32 %v395, %v397
        %v400 = vpack.c.bf16 %v399, %v398
        %v402 = vperm.slane %v304, 0
        %v408 = vunpack.c.l.b16 %v300
        %v409 = vunpack.c.l.b16 %v301
        %v410 = vunpack.c.l.b16 %v302
        %v411 = vunpack.c.l.b16 %v303
        %v412 = vpack.c.b16 %v409, %v408
        %v413 = vpack.c.b16 %v411, %v410
        %v417 = vsel %vm330, %v400, 0
        %419 = vmatpush.bf16.msra.mxu0 0
        %420 = vmatpush.bf16.msra.mxu0 0
        %421 = vmatpush.bf16.msra.mxu0 0
        %422 = vmatpush.bf16.msra.mxu0 0
        %423 = vmatpush.bf16.msra.mxu0 0
        %424 = vmatpush.bf16.msra.mxu0 0
        %425 = vmatpush.bf16.msra.mxu0 %v413
        %426 = vmatpush.bf16.msra.mxu0 %v412
        %427 = vmatmul.bf16.gmra.mxu0 %v417
        %v428 = vpop.f32.mrf.mxu0
        %v429 = vadd.f32 %v402, %v428
        %v430 = vpop.f32.mrf.mxu0
        %v431 = vadd.f32 %v402, %v430
        %432 = vdwg.mxu0
        %v433 = vpack.c.bf16 %v429, %v429
        %v434 = vpack.c.bf16 %v431, %v431
        %435 = vst [vmem:[%s294] sm:$0xf] %v433
        %436 = vst [vmem:[%s294 + $0x10] sm:$0xf] %v434
        %s437 = scalar_lea.vmem [#allocation5], 16
        %v438 = vld [vmem:[%s437] sm:$0xf]
        %v439 = vld [vmem:[%s437 + $0x4] sm:$0xf]
        %v440 = vld [vmem:[%s437 + $0x8] sm:$0xf]
        %v441 = vld [vmem:[%s437 + $0xc] sm:$0xf]
        %s442 = scalar_lea.vmem [#allocation7], 1
        %v443 = vld [vmem:[%s442] sm:$0x1]
        %v445 = vperm.slane %v443, 0
        %v451 = vunpack.c.l.b16 %v438
        %v452 = vunpack.c.l.b16 %v439
        %v453 = vunpack.c.l.b16 %v440
        %v454 = vunpack.c.l.b16 %v441
        %v455 = vpack.c.b16 %v452, %v451
        %v456 = vpack.c.b16 %v454, %v453
        %459 = vmatpush.bf16.msra.mxu0 0
        %460 = vmatpush.bf16.msra.mxu0 0
        %461 = vmatpush.bf16.msra.mxu0 0
        %462 = vmatpush.bf16.msra.mxu0 0
        %463 = vmatpush.bf16.msra.mxu0 0
        %464 = vmatpush.bf16.msra.mxu0 0
        %465 = vmatpush.bf16.msra.mxu0 %v456
        %466 = vmatpush.bf16.msra.mxu0 %v455
        %467 = vmatmul.bf16.gmra.mxu0 %v332
        %v468 = vpop.f32.mrf.mxu0
        %v469 = vadd.f32 %v445, %v468
        %v470 = vpop.f32.mrf.mxu0
        %v471 = vadd.f32 %v445, %v470
        %472 = vdwg.mxu0
        %v473 = vmul.f32 %v469, 0.70710677
        %v474 = vmul.f32 %v471, 0.70710677
        %v475 = vand.u32 2147483647, %v473
        %v476 = vand.u32 2147483647, %v474
        %v477 = vmul.f32 %v475, 0.3275911
        %v478 = vmul.f32 %v476, 0.3275911
        %v479 = vadd.f32 %v477, 1.0
        %v480 = vadd.f32 %v478, 1.0
        %v481 = vrcp.pop %v479
        %v482 = vrcp.pop %v480
        %v483 = vmul.f32 %v481, 1.0614054
        %v484 = vmul.f32 %v482, 1.0614054
        %v485 = vadd.f32 %v483, -1.4531521
        %v486 = vadd.f32 %v484, -1.4531521
        %v487 = vmul.f32 %v485, %v481
        %v488 = vmul.f32 %v486, %v482
        %v489 = vadd.f32 %v487, 1.4214138
        %v490 = vadd.f32 %v488, 1.4214138
        %v491 = vmul.f32 %v489, %v481
        %v492 = vmul.f32 %v490, %v482
        %v493 = vadd.f32 %v491, -0.28449672
        %v494 = vadd.f32 %v492, -0.28449672
        %v495 = vmul.f32 %v493, %v481
        %v496 = vmul.f32 %v494, %v482
        %v497 = vadd.f32 %v495, 0.2548296
        %v498 = vadd.f32 %v496, 0.2548296
        %v499 = vmul.f32 %v497, %v481
        %v500 = vmul.f32 %v498, %v482
        %v501 = vsub.f32 0.0, %v475
        %v502 = vsub.f32 0.0, %v476
        %v503 = vmul.f32 %v501, %v475
        %v504 = vmul.f32 %v502, %v476
        %v505 = vmul.f32 %v503, 1.442695
        %v506 = vpow.pop %v505
        %v507 = vmul.f32 %v504, 1.442695
        %v508 = vpow.pop %v507
        %v509 = vmul.f32 %v499, %v506
        %v510 = vmul.f32 %v500, %v508
        %v511 = vsub.f32 1.0, %v509
        %v512 = vsub.f32 1.0, %v510
        %vm513 = vcmp.ge.f32.partialorder %v473, 0.0
        %vm514 = vcmp.ge.f32.partialorder %v474, 0.0
        %v515 = vsub.f32 0.0, %v511
        %v516 = vsub.f32 0.0, %v512
        %v517 = vsel %vm513, %v511, %v515
        %v518 = vsel %vm514, %v512, %v516
        %v519 = vmul.f32 %v469, 0.5
        %v520 = vmul.f32 %v471, 0.5
        %v521 = vadd.f32 %v517, 1.0
        %v522 = vadd.f32 %v518, 1.0
        %v523 = vmul.f32 %v519, %v521
        %v524 = vmul.f32 %v520, %v522
        %v525 = vpack.c.bf16 %v524, %v523
        %v527 = vsel %vm330, %v525, 0
        %529 = vmatpush.bf16.msra.mxu0 0
        %530 = vmatpush.bf16.msra.mxu0 0
        %531 = vmatpush.bf16.msra.mxu0 0
        %532 = vmatpush.bf16.msra.mxu0 0
        %533 = vmatpush.bf16.msra.mxu0 0
        %534 = vmatpush.bf16.msra.mxu0 0
        %535 = vmatpush.bf16.msra.mxu0 %v413
        %536 = vmatpush.bf16.msra.mxu0 %v412
        %537 = vmatmul.bf16.gmra.mxu0 %v527
        %v538 = vpop.f32.mrf.mxu0
        %v539 = vadd.f32 %v402, %v538
        %v540 = vpop.f32.mrf.mxu0
        %v541 = vadd.f32 %v402, %v540
        %542 = vdwg.mxu0
        %v543 = vpack.c.bf16 %v539, %v539
        %v544 = vpack.c.bf16 %v541, %v541
        %545 = vst [vmem:[%s294 + $0x4] sm:$0xf] %v543
        %546 = vst [vmem:[%s294 + $0x14] sm:$0xf] %v544
        %s547 = scalar_lea.vmem [#allocation5], 32
        %v548 = vld [vmem:[%s547] sm:$0xf]
        %v549 = vld [vmem:[%s547 + $0x4] sm:$0xf]
        %v550 = vld [vmem:[%s547 + $0x8] sm:$0xf]
        %v551 = vld [vmem:[%s547 + $0xc] sm:$0xf]
        %s552 = scalar_lea.vmem [#allocation7], 2
        %v553 = vld [vmem:[%s552] sm:$0x1]
        %v555 = vperm.slane %v553, 0
        %v561 = vunpack.c.l.b16 %v548
        %v562 = vunpack.c.l.b16 %v549
        %v563 = vunpack.c.l.b16 %v550
        %v564 = vunpack.c.l.b16 %v551
        %v565 = vpack.c.b16 %v562, %v561
        %v566 = vpack.c.b16 %v564, %v563
        %569 = vmatpush.bf16.msra.mxu0 0
        %570 = vmatpush.bf16.msra.mxu0 0
        %571 = vmatpush.bf16.msra.mxu0 0
        %572 = vmatpush.bf16.msra.mxu0 0
        %573 = vmatpush.bf16.msra.mxu0 0
        %574 = vmatpush.bf16.msra.mxu0 0
        %575 = vmatpush.bf16.msra.mxu0 %v566
        %576 = vmatpush.bf16.msra.mxu0 %v565
        %577 = vmatmul.bf16.gmra.mxu0 %v332
        %v578 = vpop.f32.mrf.mxu0
        %v579 = vadd.f32 %v555, %v578
        %v580 = vpop.f32.mrf.mxu0
        %v581 = vadd.f32 %v555, %v580
        %582 = vdwg.mxu0
        %v583 = vmul.f32 %v579, 0.70710677
        %v584 = vmul.f32 %v581, 0.70710677
        %v585 = vand.u32 2147483647, %v583
        %v586 = vand.u32 2147483647, %v584
        %v587 = vmul.f32 %v585, 0.3275911
        %v588 = vmul.f32 %v586, 0.3275911
        %v589 = vadd.f32 %v587, 1.0
        %v590 = vadd.f32 %v588, 1.0
        %v591 = vrcp.pop %v589
        %v592 = vrcp.pop %v590
        %v593 = vmul.f32 %v591, 1.0614054
        %v594 = vmul.f32 %v592, 1.0614054
        %v595 = vadd.f32 %v593, -1.4531521
        %v596 = vadd.f32 %v594, -1.4531521
        %v597 = vmul.f32 %v595, %v591
        %v598 = vmul.f32 %v596, %v592
        %v599 = vadd.f32 %v597, 1.4214138
        %v600 = vadd.f32 %v598, 1.4214138
        %v601 = vmul.f32 %v599, %v591
        %v602 = vmul.f32 %v600, %v592
        %v603 = vadd.f32 %v601, -0.28449672
        %v604 = vadd.f32 %v602, -0.28449672
        %v605 = vmul.f32 %v603, %v591
        %v606 = vmul.f32 %v604, %v592
        %v607 = vadd.f32 %v605, 0.2548296
        %v608 = vadd.f32 %v606, 0.2548296
        %v609 = vmul.f32 %v607, %v591
        %v610 = vmul.f32 %v608, %v592
        %v611 = vsub.f32 0.0, %v585
        %v612 = vsub.f32 0.0, %v586
        %v613 = vmul.f32 %v611, %v585
        %v614 = vmul.f32 %v612, %v586
        %v615 = vmul.f32 %v613, 1.442695
        %v616 = vpow.pop %v615
        %v617 = vmul.f32 %v614, 1.442695
        %v618 = vpow.pop %v617
        %v619 = vmul.f32 %v609, %v616
        %v620 = vmul.f32 %v610, %v618
        %v621 = vsub.f32 1.0, %v619
        %v622 = vsub.f32 1.0, %v620
        %vm623 = vcmp.ge.f32.partialorder %v583, 0.0
        %vm624 = vcmp.ge.f32.partialorder %v584, 0.0
        %v625 = vsub.f32 0.0, %v621
        %v626 = vsub.f32 0.0, %v622
        %v627 = vsel %vm623, %v621, %v625
        %v628 = vsel %vm624, %v622, %v626
        %v629 = vmul.f32 %v579, 0.5
        %v630 = vmul.f32 %v581, 0.5
        %v631 = vadd.f32 %v627, 1.0
        %v632 = vadd.f32 %v628, 1.0
        %v633 = vmul.f32 %v629, %v631
        %v634 = vmul.f32 %v630, %v632
        %v635 = vpack.c.bf16 %v634, %v633
        %v637 = vsel %vm330, %v635, 0
        %639 = vmatpush.bf16.msra.mxu0 0
        %640 = vmatpush.bf16.msra.mxu0 0
        %641 = vmatpush.bf16.msra.mxu0 0
        %642 = vmatpush.bf16.msra.mxu0 0
        %643 = vmatpush.bf16.msra.mxu0 0
        %644 = vmatpush.bf16.msra.mxu0 0
        %645 = vmatpush.bf16.msra.mxu0 %v413
        %646 = vmatpush.bf16.msra.mxu0 %v412
        %647 = vmatmul.bf16.gmra.mxu0 %v637
        %v648 = vpop.f32.mrf.mxu0
        %v649 = vadd.f32 %v402, %v648
        %v650 = vpop.f32.mrf.mxu0
        %v651 = vadd.f32 %v402, %v650
        %652 = vdwg.mxu0
        %v653 = vpack.c.bf16 %v649, %v649
        %v654 = vpack.c.bf16 %v651, %v651
        %655 = vst [vmem:[%s294 + $0x8] sm:$0xf] %v653
        %656 = vst [vmem:[%s294 + $0x18] sm:$0xf] %v654
        %s657 = scalar_lea.vmem [#allocation5], 48
        %v658 = vld [vmem:[%s657] sm:$0xf]
        %v659 = vld [vmem:[%s657 + $0x4] sm:$0xf]
        %v660 = vld [vmem:[%s657 + $0x8] sm:$0xf]
        %v661 = vld [vmem:[%s657 + $0xc] sm:$0xf]
        %s662 = scalar_lea.vmem [#allocation7], 3
        %v663 = vld [vmem:[%s662] sm:$0x1]
        %v665 = vperm.slane %v663, 0
        %v671 = vunpack.c.l.b16 %v658
        %v672 = vunpack.c.l.b16 %v659
        %v673 = vunpack.c.l.b16 %v660
        %v674 = vunpack.c.l.b16 %v661
        %v675 = vpack.c.b16 %v672, %v671
        %v676 = vpack.c.b16 %v674, %v673
        %679 = vmatpush.bf16.msra.mxu0 0
        %680 = vmatpush.bf16.msra.mxu0 0
        %681 = vmatpush.bf16.msra.mxu0 0
        %682 = vmatpush.bf16.msra.mxu0 0
        %683 = vmatpush.bf16.msra.mxu0 0
        %684 = vmatpush.bf16.msra.mxu0 0
        %685 = vmatpush.bf16.msra.mxu0 %v676
        %686 = vmatpush.bf16.msra.mxu0 %v675
        %687 = vmatmul.bf16.gmra.mxu0 %v332
        %v688 = vpop.f32.mrf.mxu0
        %v689 = vadd.f32 %v665, %v688
        %v690 = vpop.f32.mrf.mxu0
        %v691 = vadd.f32 %v665, %v690
        %692 = vdwg.mxu0
        %v693 = vmul.f32 %v689, 0.70710677
        %v694 = vmul.f32 %v691, 0.70710677
        %v695 = vand.u32 2147483647, %v693
        %v696 = vand.u32 2147483647, %v694
        %v697 = vmul.f32 %v695, 0.3275911
        %v698 = vmul.f32 %v696, 0.3275911
        %v699 = vadd.f32 %v697, 1.0
        %v700 = vadd.f32 %v698, 1.0
        %v701 = vrcp.pop %v699
        %v702 = vrcp.pop %v700
        %v703 = vmul.f32 %v701, 1.0614054
        %v704 = vmul.f32 %v702, 1.0614054
        %v705 = vadd.f32 %v703, -1.4531521
        %v706 = vadd.f32 %v704, -1.4531521
        %v707 = vmul.f32 %v705, %v701
        %v708 = vmul.f32 %v706, %v702
        %v709 = vadd.f32 %v707, 1.4214138
        %v710 = vadd.f32 %v708, 1.4214138
        %v711 = vmul.f32 %v709, %v701
        %v712 = vmul.f32 %v710, %v702
        %v713 = vadd.f32 %v711, -0.28449672
        %v714 = vadd.f32 %v712, -0.28449672
        %v715 = vmul.f32 %v713, %v701
        %v716 = vmul.f32 %v714, %v702
        %v717 = vadd.f32 %v715, 0.2548296
        %v718 = vadd.f32 %v716, 0.2548296
        %v719 = vmul.f32 %v717, %v701
        %v720 = vmul.f32 %v718, %v702
        %v721 = vsub.f32 0.0, %v695
        %v722 = vsub.f32 0.0, %v696
        %v723 = vmul.f32 %v721, %v695
        %v724 = vmul.f32 %v722, %v696
        %v725 = vmul.f32 %v723, 1.442695
        %v726 = vpow.pop %v725
        %v727 = vmul.f32 %v724, 1.442695
        %v728 = vpow.pop %v727
        %v729 = vmul.f32 %v719, %v726
        %v730 = vmul.f32 %v720, %v728
        %v731 = vsub.f32 1.0, %v729
        %v732 = vsub.f32 1.0, %v730
        %vm733 = vcmp.ge.f32.partialorder %v693, 0.0
        %vm734 = vcmp.ge.f32.partialorder %v694, 0.0
        %v735 = vsub.f32 0.0, %v731
        %v736 = vsub.f32 0.0, %v732
        %v737 = vsel %vm733, %v731, %v735
        %v738 = vsel %vm734, %v732, %v736
        %v739 = vmul.f32 %v689, 0.5
        %v740 = vmul.f32 %v691, 0.5
        %v741 = vadd.f32 %v737, 1.0
        %v742 = vadd.f32 %v738, 1.0
        %v743 = vmul.f32 %v739, %v741
        %v744 = vmul.f32 %v740, %v742
        %v745 = vpack.c.bf16 %v744, %v743
        %v747 = vsel %vm330, %v745, 0
        %749 = vmatpush.bf16.msra.mxu0 0
        %750 = vmatpush.bf16.msra.mxu0 0
        %751 = vmatpush.bf16.msra.mxu0 0
        %752 = vmatpush.bf16.msra.mxu0 0
        %753 = vmatpush.bf16.msra.mxu0 0
        %754 = vmatpush.bf16.msra.mxu0 0
        %755 = vmatpush.bf16.msra.mxu0 %v413
        %756 = vmatpush.bf16.msra.mxu0 %v412
        %757 = vmatmul.bf16.gmra.mxu0 %v747
        %v758 = vpop.f32.mrf.mxu0
        %v759 = vadd.f32 %v402, %v758
        %v760 = vpop.f32.mrf.mxu0
        %v761 = vadd.f32 %v402, %v760
        %762 = vdwg.mxu0
        %v763 = vpack.c.bf16 %v759, %v759
        %v764 = vpack.c.bf16 %v761, %v761
        %765 = vst [vmem:[%s294 + $0xc] sm:$0xf] %v763
        %766 = vst [vmem:[%s294 + $0x1c] sm:$0xf] %v764
        %s767 = sand.u32 %s142, 1
        %s768 = scalar_lea.sflag [#allocation4], %s767
        %s769 = sand.u32 %s142, 1
        %s770 = smul.addr %s769, 32
        %s771 = scalar_lea.vmem [#allocation10], %s770
        // Predicated region
        $region57: #{tpu_custom_call.1} parent=39 // pred_check
          %p772 = pneg %p152
        $region58: #{tpu_custom_call.1} parent=39 // pred_check_branch
          %774 = sbr.rel (%p772) target = $region60
        $region59: #{tpu_custom_call.1} parent=39 // pred_region
          %s775 = smul.u32 2, %s24
          %777 = vsyncadd %s768, 0
          %s778 = smul.addr %s775, 4
          %s779 = smul.addr %s778, 4
          %s780 = scalar_lea.hbm %s5, %s779
          %s781 = sshll.u32 %s771, 4
          %s782 = int_to_ptr.vmem [resolvable:$true] %s781
          %s783 = sshll.u32 %s780, 4
          %s784 = int_to_ptr.hbm [resolvable:$true] %s783
          %789 = dma.vmem_to_hbm [thread:$0]  %s782, 512, %s784, %s768, 256, 256, 16
        $region60: #{tpu_custom_call.1} parent=39 // pred_fallthru
          _
      $region40: #{tpu_custom_call.1} parent=5 // pred_fallthru
        _
      %p790 = scmp.le.s32.totalorder 2, %s19
      // Predicated region
      $region61: #{tpu_custom_call.1} parent=5 // pred_check
        %p791 = pneg %p790
      $region62: #{tpu_custom_call.1} parent=5 // pred_check_branch
        %793 = sbr.rel (%p791) target = $region64
      $region63: #{tpu_custom_call.1} parent=5 // pred_region
        %s794 = ssub.s32 %s19, 2
        // Predicated region
        $region65: #{tpu_custom_call.1} parent=63 // pred_check
          %p795 = pneg %p158
        $region66: #{tpu_custom_call.1} parent=63 // pred_check_branch
          %797 = sbr.rel (%p795) target = $region68
        $region67: #{tpu_custom_call.1} parent=63 // pred_region
          %s798 = sand.u32 %s143, 1
          %s799 = scalar_lea.sflag [#allocation4], %s798
          %s800 = sand.u32 %s143, 1
          %s801 = smul.addr %s800, 32
          %s802 = scalar_lea.vmem [#allocation10], %s801
          %804 = dma.done %s799, 512
        $region68: #{tpu_custom_call.1} parent=63 // pred_fallthru
          _
      $region64: #{tpu_custom_call.1} parent=5 // pred_fallthru
        _
    $region6: #{tpu_custom_call.1} parent=1 // loop_footer
      %s23 = sadd.s32 1, %s19
    $region7: #{tpu_custom_call.1} parent=1 // loop_footer_branch
      %18 = sbr.rel target = $region3
    $region8: #{tpu_custom_call.1} parent=1 // loop_exit
      _
    %805 = vsyncpa [#allocation3], 1
    %s806 = scalar_lea.sflag [#allocation3], 1
    %807 = vsyncpa %s806, 1
    %808 = vsyncpa [#allocation6], 1
    %809 = vsyncpa [#allocation9], 1
    %810 = vsyncpa [#allocation4], 1
    %s811 = scalar_lea.sflag [#allocation4], 1
    %812 = vsyncpa %s811, 1

// kernel: tpu_custom_call.1
$region0: #{tpu_custom_call.1}
  #allocation0 [shape = 'u32[]', space=smem, size = 0x4, offset = 0x4, fixed_abs, tag = 'smem constant byte address 0x4 - core index']
  #allocation1 [shape = 'u32[72,128]{1,0:T(1,128)}', space=vmem, size = 0x9000, scoped, tag = 'internal scratch']
  %s0 = inlined_call_operand.hbm [shape: bf16[32,32], index: 0, kind: input, shape index: {}]
  %s1 = inlined_call_operand.hbm [shape: bf16[4,32,32], index: 1, kind: input, shape index: {}]
  %s2 = inlined_call_operand.hbm [shape: f32[4,1,32], index: 2, kind: input, shape index: {}]
  %s3 = inlined_call_operand.hbm [shape: bf16[32,128], index: 3, kind: input, shape index: {}]
  %s4 = inlined_call_operand.vmem [shape: f32[1,128], index: 4, kind: input, shape index: {}]
  %s5 = inlined_call_operand.hbm [shape: bf16[32,512], index: 5, kind: output, shape index: {}]
  %s6 = sld [smem:[#allocation0]]
  $region69: #{tpu_custom_call.1} parent=0
    _
  %s8 = ssub.s32 1, %s6
  %s9 = scalar_select 0, %s8, %s6
  $region1: #{tpu_custom_call.1} parent=0
    #allocation2 [shape = 'u8[8192]{0}', space=vmem, size = 0x2000, scoped, tag = 'input window, operand 0']
    #allocation3 [shape = 's32[2]{0}', space=sflag, size = 0x8, scoped, tag = 'scoped memory for tpu_custom_call.1']
    #allocation4 [shape = 's32[2]{0}', space=sflag, size = 0x8, scoped, tag = 'scoped memory for tpu_custom_call.1']
    #allocation5 [shape = 'u8[32768]{0}', space=vmem, size = 0x8000, scoped, tag = 'input window, operand 1, single buffered']
    #allocation6 [shape = 's32[1]{0}', space=sflag, size = 0x4, scoped, tag = 'scoped memory for tpu_custom_call.1']
    #allocation7 [shape = 'u8[2048]{0}', space=vmem, size = 0x800, scoped, tag = 'input window, operand 2, single buffered']
    #allocation8 [shape = 'u8[8192]{0}', space=vmem, size = 0x2000, scoped, tag = 'input window, operand 3, single buffered']
    #allocation9 [shape = 's32[1]{0}', space=sflag, size = 0x4, scoped, tag = 'scoped memory for tpu_custom_call.1']
    #allocation10 [shape = 'u8[32768]{0}', space=vmem, size = 0x8000, scoped, tag = 'output window, operand 0']
    %10 = vsyncpa [#allocation3], 0
    %s11 = scalar_lea.sflag [#allocation3], 1
    %12 = vsyncpa %s11, 0
    %13 = vsyncpa [#allocation6], 0
    %14 = vsyncpa [#allocation9], 0
    %15 = vsyncpa [#allocation4], 0
    %s16 = scalar_lea.sflag [#allocation4], 1
    %17 = vsyncpa %s16, 0
    loop: start=0, step=1, limit=4
    $region2: #{tpu_custom_call.1} parent=1 // loop_pre_header
      _
    $region3: #{tpu_custom_call.1} parent=1 // loop_header
      %s19 = sphi 0, %s23
      %p20 = scmp.ge.s32.totalorder %s19, 4
      %s29 = sphi 0, %s31
      %s32 = sphi 0, %s29
      %s33 = sphi 0, %s32
      %s49 = sphi 0, %s33
      %s53 = sphi 0, %s53
      %s55 = sphi 0, %s53
      %s56 = sphi 0, %s55
      %s70 = sphi 0, %s56
      %s74 = sphi 0, %s74
      %s76 = sphi 0, %s74
      %s77 = sphi 0, %s76
      %s91 = sphi 0, %s77
      %s95 = sphi 0, %s95
      %s97 = sphi 0, %s95
      %s98 = sphi 0, %s97
      %s112 = sphi 0, %s98
      %s116 = sphi 0, %s116
      %s118 = sphi 0, %s116
      %s119 = sphi 0, %s118
      %s133 = sphi 0, %s119
      %s139 = sphi 0, %s141
      %s142 = sphi 0, %s139
      %s143 = sphi 0, %s142
      %s159 = sphi 0, %s143
    $region4: #{tpu_custom_call.1} parent=1 // loop_header_branch
      %22 = sbr.rel (%p20) target = $region8
    $region5: #{tpu_custom_call.1} parent=1 // loop_body
      %s24 = ssub.s32 %s19, 1
      %s25 = ssub.s32 %s19, 2
      %s26 = sadd.s32 %s19, 1
      %s27 = ssub.s32 %s19, %s26
      %p28 = scmp.eq.s32.totalorder %s27, 0
      %s30 = sadd.s32 %s29, 1
      %s31 = scalar_select %p28, %s29, %s30
      %p34 = pneg %p28
      %p35 = scmp.eq.s32.totalorder %s19, 1
      %p36 = por %p34, %p35
      %p37 = scmp.ne.s32.totalorder %s29, %s32
      %p38 = scmp.eq.s32.totalorder %s19, 0
      %p39 = por %p37, %p38
      %p40 = scmp.ne.s32.totalorder %s29, %s32
      %p41 = scmp.eq.s32.totalorder %s24, 1
      %p42 = por %p40, %p41
      %p43 = scmp.ne.s32.totalorder %s32, %s33
      %p44 = scmp.eq.s32.totalorder %s24, 0
      %p45 = por %p43, %p44
      %p46 = scmp.ne.s32.totalorder %s32, %s33
      %p47 = scmp.eq.s32.totalorder %s25, 1
      %p48 = por %p46, %p47
      %p50 = scmp.ne.s32.totalorder %s33, %s49
      %p51 = scmp.eq.s32.totalorder %s25, 0
      %p52 = por %p50, %p51
      %s54 = sadd.s32 %s53, 1
      %p57 = scmp.eq.s32.totalorder %s19, 1
      %p58 = scmp.ne.s32.totalorder %s53, %s55
      %p59 = scmp.eq.s32.totalorder %s19, 0
      %p60 = por %p58, %p59
      %p61 = scmp.ne.s32.totalorder %s53, %s55
      %p62 = scmp.eq.s32.totalorder %s24, 1
      %p63 = por %p61, %p62
      %p64 = scmp.ne.s32.totalorder %s55, %s56
      %p65 = scmp.eq.s32.totalorder %s24, 0
      %p66 = por %p64, %p65
      %p67 = scmp.ne.s32.totalorder %s55, %s56
      %p68 = scmp.eq.s32.totalorder %s25, 1
      %p69 = por %p67, %p68
      %p71 = scmp.ne.s32.totalorder %s56, %s70
      %p72 = scmp.eq.s32.totalorder %s25, 0
      %p73 = por %p71, %p72
      %s75 = sadd.s32 %s74, 1
      %p78 = scmp.eq.s32.totalorder %s19, 1
      %p79 = scmp.ne.s32.totalorder %s74, %s76
      %p80 = scmp.eq.s32.totalorder %s19, 0
      %p81 = por %p79, %p80
      %p82 = scmp.ne.s32.totalorder %s74, %s76
      %p83 = scmp.eq.s32.totalorder %s24, 1
      %p84 = por %p82, %p83
      %p85 = scmp.ne.s32.totalorder %s76, %s77
      %p86 = scmp.eq.s32.totalorder %s24, 0
      %p87 = por %p85, %p86
      %p88 = scmp.ne.s32.totalorder %s76, %s77
      %p89 = scmp.eq.s32.totalorder %s25, 1
      %p90 = por %p88, %p89
      %p92 = scmp.ne.s32.totalorder %s77, %s91
      %p93 = scmp.eq.s32.totalorder %s25, 0
      %p94 = por %p92, %p93
      %s96 = sadd.s32 %s95, 1
      %p99 = scmp.eq.s32.totalorder %s19, 1
      %p100 = scmp.ne.s32.totalorder %s95, %s97
      %p101 = scmp.eq.s32.totalorder %s19, 0
      %p102 = por %p100, %p101
      %p103 = scmp.ne.s32.totalorder %s95, %s97
      %p104 = scmp.eq.s32.totalorder %s24, 1
      %p105 = por %p103, %p104
      %p106 = scmp.ne.s32.totalorder %s97, %s98
      %p107 = scmp.eq.s32.totalorder %s24, 0
      %p108 = por %p106, %p107
      %p109 = scmp.ne.s32.totalorder %s97, %s98
      %p110 = scmp.eq.s32.totalorder %s25, 1
      %p111 = por %p109, %p110
      %p113 = scmp.ne.s32.totalorder %s98, %s112
      %p114 = scmp.eq.s32.totalorder %s25, 0
      %p115 = por %p113, %p114
      %s117 = sadd.s32 %s116, 1
      %p120 = scmp.eq.s32.totalorder %s19, 1
      %p121 = scmp.ne.s32.totalorder %s116, %s118
      %p122 = scmp.eq.s32.totalorder %s19, 0
      %p123 = por %p121, %p122
      %p124 = scmp.ne.s32.totalorder %s116, %s118
      %p125 = scmp.eq.s32.totalorder %s24, 1
      %p126 = por %p124, %p125
      %p127 = scmp.ne.s32.totalorder %s118, %s119
      %p128 = scmp.eq.s32.totalorder %s24, 0
      %p129 = por %p127, %p128
      %p130 = scmp.ne.s32.totalorder %s118, %s119
      %p131 = scmp.eq.s32.totalorder %s25, 1
      %p132 = por %p130, %p131
      %p134 = scmp.ne.s32.totalorder %s119, %s133
      %p135 = scmp.eq.s32.totalorder %s25, 0
      %p136 = por %p134, %p135
      %s137 = ssub.s32 %s19, %s26
      %p138 = scmp.eq.s32.totalorder %s137, 0
      %s140 = sadd.s32 %s139, 1
      %s141 = scalar_select %p138, %s139, %s140
      %p144 = pneg %p138
      %p145 = scmp.eq.s32.totalorder %s19, 1
      %p146 = por %p144, %p145
      %p147 = scmp.ne.s32.totalorder %s139, %s142
      %p148 = scmp.eq.s32.totalorder %s19, 0
      %p149 = por %p147, %p148
      %p150 = scmp.ne.s32.totalorder %s139, %s142
      %p151 = scmp.eq.s32.totalorder %s24, 1
      %p152 = por %p150, %p151
      %p153 = scmp.ne.s32.totalorder %s142, %s143
      %p154 = scmp.eq.s32.totalorder %s24, 0
      %p155 = por %p153, %p154
      %p156 = scmp.ne.s32.totalorder %s142, %s143
      %p157 = scmp.eq.s32.totalorder %s25, 1
      %p158 = por %p156, %p157
      %p160 = scmp.ne.s32.totalorder %s143, %s159
      %p161 = scmp.eq.s32.totalorder %s25, 0
      %p162 = por %p160, %p161
      %p163 = scmp.le.s32.totalorder 1, %s19
      %p164 = scmp.lt.s32.totalorder %s19, 3
      %p165 = pnand %p163, %p164
      %p166 = pneg %p165
      // Predicated region
      $region9: #{tpu_custom_call.1} parent=5 // pred_check
        _
      $region10: #{tpu_custom_call.1} parent=5 // pred_check_branch
        %168 = sbr.rel (%p165) target = $region12
      $region11: #{tpu_custom_call.1} parent=5 // pred_region
        %s169 = ssub.s32 %s19, 1
        // Predicated region
        $region13: #{tpu_custom_call.1} parent=11 // pred_check
          %p170 = pneg %p66
        $region14: #{tpu_custom_call.1} parent=11 // pred_check_branch
          %172 = sbr.rel (%p170) target = $region16
        $region15: #{tpu_custom_call.1} parent=11 // pred_region
          %174 = vsyncadd [#allocation6], 0
          %s175 = sshll.u32 %s1, 4
          %s176 = int_to_ptr.hbm [resolvable:$true] %s175
          %s177 = sshll.u32 [#allocation5], 4
          %s178 = int_to_ptr.vmem [resolvable:$true] %s177
          %183 = dma.hbm_to_vmem [thread:$0]  %s176, 1024, %s178, [#allocation6], 64, 64, 4
        $region16: #{tpu_custom_call.1} parent=11 // pred_fallthru
          _
        // Predicated region
        $region17: #{tpu_custom_call.1} parent=11 // pred_check
          %p184 = pneg %p87
        $region18: #{tpu_custom_call.1} parent=11 // pred_check_branch
          %186 = sbr.rel (%p184) target = $region20
        $region19: #{tpu_custom_call.1} parent=11 // pred_region
          %188 = vsyncadd [#allocation6], 0
          %s189 = sshll.u32 %s2, 4
          %s190 = int_to_ptr.hbm [resolvable:$true] %s189
          %s191 = sshll.u32 [#allocation7], 4
          %s192 = int_to_ptr.vmem [resolvable:$true] %s191
          %197 = dma.hbm_to_vmem [thread:$0]  %s190, 64, %s192, [#allocation6], 16, 16, 1
        $region20: #{tpu_custom_call.1} parent=11 // pred_fallthru
          _
        // Predicated region
        $region21: #{tpu_custom_call.1} parent=11 // pred_check
          %p198 = pneg %p108
        $region22: #{tpu_custom_call.1} parent=11 // pred_check_branch
          %200 = sbr.rel (%p198) target = $region24
        $region23: #{tpu_custom_call.1} parent=11 // pred_region
          %202 = vsyncadd [#allocation9], 0
          %s203 = sshll.u32 %s3, 4
          %s204 = int_to_ptr.hbm [resolvable:$true] %s203
          %s205 = sshll.u32 [#allocation8], 4
          %s206 = int_to_ptr.vmem [resolvable:$true] %s205
          %211 = dma.hbm_to_vmem [thread:$0]  %s204, 256, %s206, [#allocation9], 64, 64, 4
        $region24: #{tpu_custom_call.1} parent=11 // pred_fallthru
          _
        // Predicated region
        $region25: #{tpu_custom_call.1} parent=11 // pred_check
          %p212 = pneg %p129
        $region26: #{tpu_custom_call.1} parent=11 // pred_check_branch
          %214 = sbr.rel (%p212) target = $region28
        $region27: #{tpu_custom_call.1} parent=11 // pred_region
          _
        $region28: #{tpu_custom_call.1} parent=11 // pred_fallthru
          _
      $region12: #{tpu_custom_call.1} parent=5 // pred_fallthru
        _
      %p215 = scmp.lt.s32.totalorder %s19, 2
      // Predicated region
      $region29: #{tpu_custom_call.1} parent=5 // pred_check
        %p216 = pneg %p215
      $region30: #{tpu_custom_call.1} parent=5 // pred_check_branch
        %218 = sbr.rel (%p216) target = $region32
      $region31: #{tpu_custom_call.1} parent=5 // pred_region
        // Predicated region
        $region33: #{tpu_custom_call.1} parent=31 // pred_check
          %p219 = pneg %p39
        $region34: #{tpu_custom_call.1} parent=31 // pred_check_branch
          %221 = sbr.rel (%p219) target = $region36
        $region35: #{tpu_custom_call.1} parent=31 // pred_region
          %s222 = sand.u32 %s29, 1
          %s223 = scalar_lea.sflag [#allocation3], %s222
          %s224 = sand.u32 %s29, 1
          %s225 = smul.addr %s224, 8
          %s226 = scalar_lea.vmem [#allocation2], %s225
          %s227 = smul.u32 2, %s19
          %229 = vsyncadd %s223, 0
          %s230 = smul.addr %s227, 4
          %s231 = scalar_lea.hbm %s0, %s230
          %s232 = sshll.u32 %s231, 4
          %s233 = int_to_ptr.hbm [resolvable:$true] %s232
          %s234 = sshll.u32 %s226, 4
          %s235 = int_to_ptr.vmem [resolvable:$true] %s234
          %240 = dma.hbm_to_vmem [thread:$0]  %s233, 128, %s235, %s223, 64, 64, 4
        $region36: #{tpu_custom_call.1} parent=31 // pred_fallthru
          _
      $region32: #{tpu_custom_call.1} parent=5 // pred_fallthru
        _
      %p241 = scmp.le.s32.totalorder 1, %s19
      %p242 = scmp.lt.s32.totalorder %s19, 3
      %p243 = pnand %p241, %p242
      %p244 = pneg %p243
      // Predicated region
      $region37: #{tpu_custom_call.1} parent=5 // pred_check
        _
      $region38: #{tpu_custom_call.1} parent=5 // pred_check_branch
        %246 = sbr.rel (%p243) target = $region40
      $region39: #{tpu_custom_call.1} parent=5 // pred_region
        %s247 = ssub.s32 %s19, 1
        %s248 = sand.u32 %s32, 1
        %s249 = scalar_lea.sflag [#allocation3], %s248
        %s250 = sand.u32 %s32, 1
        %s251 = smul.addr %s250, 8
        %s252 = scalar_lea.vmem [#allocation2], %s251
        // Predicated region
        $region41: #{tpu_custom_call.1} parent=39 // pred_check
          %p253 = pneg %p45
        $region42: #{tpu_custom_call.1} parent=39 // pred_check_branch
          %255 = sbr.rel (%p253) target = $region44
        $region43: #{tpu_custom_call.1} parent=39 // pred_region
          %257 = dma.done %s249, 128
        $region44: #{tpu_custom_call.1} parent=39 // pred_fallthru
          _
        // Predicated region
        $region45: #{tpu_custom_call.1} parent=39 // pred_check
          %p258 = pneg %p66
        $region46: #{tpu_custom_call.1} parent=39 // pred_check_branch
          %260 = sbr.rel (%p258) target = $region48
        $region47: #{tpu_custom_call.1} parent=39 // pred_region
          %262 = dma.done [#allocation6], 1024
        $region48: #{tpu_custom_call.1} parent=39 // pred_fallthru
          _
        // Predicated region
        $region49: #{tpu_custom_call.1} parent=39 // pred_check
          %p263 = pneg %p87
        $region50: #{tpu_custom_call.1} parent=39 // pred_check_branch
          %265 = sbr.rel (%p263) target = $region52
        $region51: #{tpu_custom_call.1} parent=39 // pred_region
          %267 = dma.done [#allocation6], 64
        $region52: #{tpu_custom_call.1} parent=39 // pred_fallthru
          _
        // Predicated region
        $region53: #{tpu_custom_call.1} parent=39 // pred_check
          %p268 = pneg %p108
        $region54: #{tpu_custom_call.1} parent=39 // pred_check_branch
          %270 = sbr.rel (%p268) target = $region56
        $region55: #{tpu_custom_call.1} parent=39 // pred_region
          %272 = dma.done [#allocation9], 256
        $region56: #{tpu_custom_call.1} parent=39 // pred_fallthru
          _
        %s273 = sand.u32 %s32, 1
        %s274 = scalar_lea.sflag [#allocation3], %s273
        %s275 = sand.u32 %s32, 1
        %s276 = smul.addr %s275, 8
        %s277 = scalar_lea.vmem [#allocation2], %s276
        %p278 = pneg %p45
        %p279 = pneg %p42
        %p280 = pneg %p66
        %p281 = pneg %p63
        %p282 = pneg %p87
        %p283 = pneg %p84
        %p284 = pneg %p108
        %p285 = pneg %p105
        %p286 = pneg %p129
        %p287 = pneg %p126
        %p288 = pneg %p155
        %p289 = pneg %p152
        %s290 = sand.u32 %s142, 1
        %s291 = scalar_lea.sflag [#allocation4], %s290
        %s292 = sand.u32 %s142, 1
        %s293 = smul.addr %s292, 32
        %s294 = scalar_lea.vmem [#allocation10], %s293
        %s295 = smul.u32 2, %s24
        %s296 = smul.u32 2, %s24
        %v298 = vld [vmem:[%s252] sm:$0xf]
        %v299 = vld [vmem:[%s252 + $0x4] sm:$0xf]
        %v300 = vld [vmem:[#allocation8] sm:$0xf]
        %v301 = vld [vmem:[#allocation8 + $0x4] sm:$0xf]
        %v302 = vld [vmem:[#allocation8 + $0x8] sm:$0xf]
        %v303 = vld [vmem:[#allocation8 + $0xc] sm:$0xf]
        %v304 = vld [vmem:[%s4] sm:$0x1]
        %v305 = vld [vmem:[#allocation5] sm:$0xf]
        %v306 = vld [vmem:[#allocation5 + $0x4] sm:$0xf]
        %v307 = vld [vmem:[#allocation5 + $0x8] sm:$0xf]
        %v308 = vld [vmem:[#allocation5 + $0xc] sm:$0xf]
        %v309 = vld [vmem:[#allocation7] sm:$0x1]
        %v311 = vperm.slane %v309, 0
        %v315 = vunpack.c.l.b16 %v298
        %v316 = vunpack.c.l.b16 %v299
        %v317 = vpack.c.b16 %v316, %v315
        %v322 = vunpack.c.l.b16 %v305
        %v323 = vunpack.c.l.b16 %v306
        %v324 = vunpack.c.l.b16 %v307
        %v325 = vunpack.c.l.b16 %v308
        %v326 = vpack.c.b16 %v323, %v322
        %v327 = vpack.c.b16 %v325, %v324
        %vm330 = vcmask 261120
        %v332 = vsel %vm330, %v317, 0
        %334 = vmatpush.bf16.msra.mxu0 0
        %335 = vmatpush.bf16.msra.mxu0 0
        %336 = vmatpush.bf16.msra.mxu0 0
        %337 = vmatpush.bf16.msra.mxu0 0
        %338 = vmatpush.bf16.msra.mxu0 0
        %339 = vmatpush.bf16.msra.mxu0 0
        %340 = vmatpush.bf16.msra.mxu0 %v327
        %341 = vmatpush.bf16.msra.mxu0 %v326
        %342 = vmatmul.bf16.gmra.mxu0 %v332
        %v343 = vpop.f32.mrf.mxu0
        %v344 = vadd.f32 %v311, %v343
        %v345 = vpop.f32.mrf.mxu0
        %v346 = vadd.f32 %v311, %v345
        %347 = vdwg.mxu0
        %v348 = vmul.f32 %v344, 0.70710677
        %v349 = vmul.f32 %v346, 0.70710677
        %v350 = vand.u32 2147483647, %v348
        %v351 = vand.u32 2147483647, %v349
        %v352 = vmul.f32 %v350, 0.3275911
        %v353 = vmul.f32 %v351, 0.3275911
        %v354 = vadd.f32 %v352, 1.0
        %v355 = vadd.f32 %v353, 1.0
        %v356 = vrcp.pop %v354
        %v357 = vrcp.pop %v355
        %v358 = vmul.f32 %v356, 1.0614054
        %v359 = vmul.f32 %v357, 1.0614054
        %v360 = vadd.f32 %v358, -1.4531521
        %v361 = vadd.f32 %v359, -1.4531521
        %v362 = vmul.f32 %v360, %v356
        %v363 = vmul.f32 %v361, %v357
        %v364 = vadd.f32 %v362, 1.4214138
        %v365 = vadd.f32 %v363, 1.4214138
        %v366 = vmul.f32 %v364, %v356
        %v367 = vmul.f32 %v365, %v357
        %v368 = vadd.f32 %v366, -0.28449672
        %v369 = vadd.f32 %v367, -0.28449672
        %v370 = vmul.f32 %v368, %v356
        %v371 = vmul.f32 %v369, %v357
        %v372 = vadd.f32 %v370, 0.2548296
        %v373 = vadd.f32 %v371, 0.2548296
        %v374 = vmul.f32 %v372, %v356
        %v375 = vmul.f32 %v373, %v357
        %v376 = vsub.f32 0.0, %v350
        %v377 = vsub.f32 0.0, %v351
        %v378 = vmul.f32 %v376, %v350
        %v379 = vmul.f32 %v377, %v351
        %v380 = vmul.f32 %v378, 1.442695
        %v381 = vpow.pop %v380
        %v382 = vmul.f32 %v379, 1.442695
        %v383 = vpow.pop %v382
        %v384 = vmul.f32 %v374, %v381
        %v385 = vmul.f32 %v375, %v383
        %v386 = vsub.f32 1.0, %v384
        %v387 = vsub.f32 1.0, %v385
        %vm388 = vcmp.ge.f32.partialorder %v348, 0.0
        %vm389 = vcmp.ge.f32.partialorder %v349, 0.0
        %v390 = vsub.f32 0.0, %v386
        %v391 = vsub.f32 0.0, %v387
        %v392 = vsel %vm388, %v386, %v390
        %v393 = vsel %vm389, %v387, %v391
        %v394 = vmul.f32 %v344, 0.5
        %v395 = vmul.f32 %v346, 0.5
        %v396 = vadd.f32 %v392, 1.0
        %v397 = vadd.f32 %v393, 1.0
        %v398 = vmul.f32 %v394, %v396
        %v399 = vmul.f32 %v395, %v397
        %v400 = vpack.c.bf16 %v399, %v398
        %v402 = vperm.slane %v304, 0
        %v408 = vunpack.c.l.b16 %v300
        %v409 = vunpack.c.l.b16 %v301
        %v410 = vunpack.c.l.b16 %v302
        %v411 = vunpack.c.l.b16 %v303
        %v412 = vpack.c.b16 %v409, %v408
        %v413 = vpack.c.b16 %v411, %v410
        %v417 = vsel %vm330, %v400, 0
        %419 = vmatpush.bf16.msra.mxu0 0
        %420 = vmatpush.bf16.msra.mxu0 0
        %421 = vmatpush.bf16.msra.mxu0 0
        %422 = vmatpush.bf16.msra.mxu0 0
        %423 = vmatpush.bf16.msra.mxu0 0
        %424 = vmatpush.bf16.msra.mxu0 0
        %425 = vmatpush.bf16.msra.mxu0 %v413
        %426 = vmatpush.bf16.msra.mxu0 %v412
        %427 = vmatmul.bf16.gmra.mxu0 %v417
        %v428 = vpop.f32.mrf.mxu0
        %v429 = vadd.f32 %v402, %v428
        %v430 = vpop.f32.mrf.mxu0
        %v431 = vadd.f32 %v402, %v430
        %432 = vdwg.mxu0
        %v433 = vpack.c.bf16 %v429, %v429
        %v434 = vpack.c.bf16 %v431, %v431
        %435 = vst [vmem:[%s294] sm:$0xf] %v433
        %436 = vst [vmem:[%s294 + $0x10] sm:$0xf] %v434
        %s437 = scalar_lea.vmem [#allocation5], 16
        %v438 = vld [vmem:[%s437] sm:$0xf]
        %v439 = vld [vmem:[%s437 + $0x4] sm:$0xf]
        %v440 = vld [vmem:[%s437 + $0x8] sm:$0xf]
        %v441 = vld [vmem:[%s437 + $0xc] sm:$0xf]
        %s442 = scalar_lea.vmem [#allocation7], 1
        %v443 = vld [vmem:[%s442] sm:$0x1]
        %v445 = vperm.slane %v443, 0
        %v451 = vunpack.c.l.b16 %v438
        %v452 = vunpack.c.l.b16 %v439
        %v453 = vunpack.c.l.b16 %v440
        %v454 = vunpack.c.l.b16 %v441
        %v455 = vpack.c.b16 %v452, %v451
        %v456 = vpack.c.b16 %v454, %v453
        %459 = vmatpush.bf16.msra.mxu0 0
        %460 = vmatpush.bf16.msra.mxu0 0
        %461 = vmatpush.bf16.msra.mxu0 0
        %462 = vmatpush.bf16.msra.mxu0 0
        %463 = vmatpush.bf16.msra.mxu0 0
        %464 = vmatpush.bf16.msra.mxu0 0
        %465 = vmatpush.bf16.msra.mxu0 %v456
        %466 = vmatpush.bf16.msra.mxu0 %v455
        %467 = vmatmul.bf16.gmra.mxu0 %v332
        %v468 = vpop.f32.mrf.mxu0
        %v469 = vadd.f32 %v445, %v468
        %v470 = vpop.f32.mrf.mxu0
        %v471 = vadd.f32 %v445, %v470
        %472 = vdwg.mxu0
        %v473 = vmul.f32 %v469, 0.70710677
        %v474 = vmul.f32 %v471, 0.70710677
        %v475 = vand.u32 2147483647, %v473
        %v476 = vand.u32 2147483647, %v474
        %v477 = vmul.f32 %v475, 0.3275911
        %v478 = vmul.f32 %v476, 0.3275911
        %v479 = vadd.f32 %v477, 1.0
        %v480 = vadd.f32 %v478, 1.0
        %v481 = vrcp.pop %v479
        %v482 = vrcp.pop %v480
        %v483 = vmul.f32 %v481, 1.0614054
        %v484 = vmul.f32 %v482, 1.0614054
        %v485 = vadd.f32 %v483, -1.4531521
        %v486 = vadd.f32 %v484, -1.4531521
        %v487 = vmul.f32 %v485, %v481
        %v488 = vmul.f32 %v486, %v482
        %v489 = vadd.f32 %v487, 1.4214138
        %v490 = vadd.f32 %v488, 1.4214138
        %v491 = vmul.f32 %v489, %v481
        %v492 = vmul.f32 %v490, %v482
        %v493 = vadd.f32 %v491, -0.28449672
        %v494 = vadd.f32 %v492, -0.28449672
        %v495 = vmul.f32 %v493, %v481
        %v496 = vmul.f32 %v494, %v482
        %v497 = vadd.f32 %v495, 0.2548296
        %v498 = vadd.f32 %v496, 0.2548296
        %v499 = vmul.f32 %v497, %v481
        %v500 = vmul.f32 %v498, %v482
        %v501 = vsub.f32 0.0, %v475
        %v502 = vsub.f32 0.0, %v476
        %v503 = vmul.f32 %v501, %v475
        %v504 = vmul.f32 %v502, %v476
        %v505 = vmul.f32 %v503, 1.442695
        %v506 = vpow.pop %v505
        %v507 = vmul.f32 %v504, 1.442695
        %v508 = vpow.pop %v507
        %v509 = vmul.f32 %v499, %v506
        %v510 = vmul.f32 %v500, %v508
        %v511 = vsub.f32 1.0, %v509
        %v512 = vsub.f32 1.0, %v510
        %vm513 = vcmp.ge.f32.partialorder %v473, 0.0
        %vm514 = vcmp.ge.f32.partialorder %v474, 0.0
        %v515 = vsub.f32 0.0, %v511
        %v516 = vsub.f32 0.0, %v512
        %v517 = vsel %vm513, %v511, %v515
        %v518 = vsel %vm514, %v512, %v516
        %v519 = vmul.f32 %v469, 0.5
        %v520 = vmul.f32 %v471, 0.5
        %v521 = vadd.f32 %v517, 1.0
        %v522 = vadd.f32 %v518, 1.0
        %v523 = vmul.f32 %v519, %v521
        %v524 = vmul.f32 %v520, %v522
        %v525 = vpack.c.bf16 %v524, %v523
        %v527 = vsel %vm330, %v525, 0
        %529 = vmatpush.bf16.msra.mxu0 0
        %530 = vmatpush.bf16.msra.mxu0 0
        %531 = vmatpush.bf16.msra.mxu0 0
        %532 = vmatpush.bf16.msra.mxu0 0
        %533 = vmatpush.bf16.msra.mxu0 0
        %534 = vmatpush.bf16.msra.mxu0 0
        %535 = vmatpush.bf16.msra.mxu0 %v413
        %536 = vmatpush.bf16.msra.mxu0 %v412
        %537 = vmatmul.bf16.gmra.mxu0 %v527
        %v538 = vpop.f32.mrf.mxu0
        %v539 = vadd.f32 %v402, %v538
        %v540 = vpop.f32.mrf.mxu0
        %v541 = vadd.f32 %v402, %v540
        %542 = vdwg.mxu0
        %v543 = vpack.c.bf16 %v539, %v539
        %v544 = vpack.c.bf16 %v541, %v541
        %545 = vst [vmem:[%s294 + $0x4] sm:$0xf] %v543
        %546 = vst [vmem:[%s294 + $0x14] sm:$0xf] %v544
        %s547 = scalar_lea.vmem [#allocation5], 32
        %v548 = vld [vmem:[%s547] sm:$0xf]
        %v549 = vld [vmem:[%s547 + $0x4] sm:$0xf]
        %v550 = vld [vmem:[%s547 + $0x8] sm:$0xf]
        %v551 = vld [vmem:[%s547 + $0xc] sm:$0xf]
        %s552 = scalar_lea.vmem [#allocation7], 2
        %v553 = vld [vmem:[%s552] sm:$0x1]
        %v555 = vperm.slane %v553, 0
        %v561 = vunpack.c.l.b16 %v548
        %v562 = vunpack.c.l.b16 %v549
        %v563 = vunpack.c.l.b16 %v550
        %v564 = vunpack.c.l.b16 %v551
        %v565 = vpack.c.b16 %v562, %v561
        %v566 = vpack.c.b16 %v564, %v563
        %569 = vmatpush.bf16.msra.mxu0 0
        %570 = vmatpush.bf16.msra.mxu0 0
        %571 = vmatpush.bf16.msra.mxu0 0
        %572 = vmatpush.bf16.msra.mxu0 0
        %573 = vmatpush.bf16.msra.mxu0 0
        %574 = vmatpush.bf16.msra.mxu0 0
        %575 = vmatpush.bf16.msra.mxu0 %v566
        %576 = vmatpush.bf16.msra.mxu0 %v565
        %577 = vmatmul.bf16.gmra.mxu0 %v332
        %v578 = vpop.f32.mrf.mxu0
        %v579 = vadd.f32 %v555, %v578
        %v580 = vpop.f32.mrf.mxu0
        %v581 = vadd.f32 %v555, %v580
        %582 = vdwg.mxu0
        %v583 = vmul.f32 %v579, 0.70710677
        %v584 = vmul.f32 %v581, 0.70710677
        %v585 = vand.u32 2147483647, %v583
        %v586 = vand.u32 2147483647, %v584
        %v587 = vmul.f32 %v585, 0.3275911
        %v588 = vmul.f32 %v586, 0.3275911
        %v589 = vadd.f32 %v587, 1.0
        %v590 = vadd.f32 %v588, 1.0
        %v591 = vrcp.pop %v589
        %v592 = vrcp.pop %v590
        %v593 = vmul.f32 %v591, 1.0614054
        %v594 = vmul.f32 %v592, 1.0614054
        %v595 = vadd.f32 %v593, -1.4531521
        %v596 = vadd.f32 %v594, -1.4531521
        %v597 = vmul.f32 %v595, %v591
        %v598 = vmul.f32 %v596, %v592
        %v599 = vadd.f32 %v597, 1.4214138
        %v600 = vadd.f32 %v598, 1.4214138
        %v601 = vmul.f32 %v599, %v591
        %v602 = vmul.f32 %v600, %v592
        %v603 = vadd.f32 %v601, -0.28449672
        %v604 = vadd.f32 %v602, -0.28449672
        %v605 = vmul.f32 %v603, %v591
        %v606 = vmul.f32 %v604, %v592
        %v607 = vadd.f32 %v605, 0.2548296
        %v608 = vadd.f32 %v606, 0.2548296
        %v609 = vmul.f32 %v607, %v591
        %v610 = vmul.f32 %v608, %v592
        %v611 = vsub.f32 0.0, %v585
        %v612 = vsub.f32 0.0, %v586
        %v613 = vmul.f32 %v611, %v585
        %v614 = vmul.f32 %v612, %v586
        %v615 = vmul.f32 %v613, 1.442695
        %v616 = vpow.pop %v615
        %v617 = vmul.f32 %v614, 1.442695
        %v618 = vpow.pop %v617
        %v619 = vmul.f32 %v609, %v616
        %v620 = vmul.f32 %v610, %v618
        %v621 = vsub.f32 1.0, %v619
        %v622 = vsub.f32 1.0, %v620
        %vm623 = vcmp.ge.f32.partialorder %v583, 0.0
        %vm624 = vcmp.ge.f32.partialorder %v584, 0.0
        %v625 = vsub.f32 0.0, %v621
        %v626 = vsub.f32 0.0, %v622
        %v627 = vsel %vm623, %v621, %v625
        %v628 = vsel %vm624, %v622, %v626
        %v629 = vmul.f32 %v579, 0.5
        %v630 = vmul.f32 %v581, 0.5
        %v631 = vadd.f32 %v627, 1.0
        %v632 = vadd.f32 %v628, 1.0
        %v633 = vmul.f32 %v629, %v631
        %v634 = vmul.f32 %v630, %v632
        %v635 = vpack.c.bf16 %v634, %v633
        %v637 = vsel %vm330, %v635, 0
        %639 = vmatpush.bf16.msra.mxu0 0
        %640 = vmatpush.bf16.msra.mxu0 0
        %641 = vmatpush.bf16.msra.mxu0 0
        %642 = vmatpush.bf16.msra.mxu0 0
        %643 = vmatpush.bf16.msra.mxu0 0
        %644 = vmatpush.bf16.msra.mxu0 0
        %645 = vmatpush.bf16.msra.mxu0 %v413
        %646 = vmatpush.bf16.msra.mxu0 %v412
        %647 = vmatmul.bf16.gmra.mxu0 %v637
        %v648 = vpop.f32.mrf.mxu0
        %v649 = vadd.f32 %v402, %v648
        %v650 = vpop.f32.mrf.mxu0
        %v651 = vadd.f32 %v402, %v650
        %652 = vdwg.mxu0
        %v653 = vpack.c.bf16 %v649, %v649
        %v654 = vpack.c.bf16 %v651, %v651
        %655 = vst [vmem:[%s294 + $0x8] sm:$0xf] %v653
        %656 = vst [vmem:[%s294 + $0x18] sm:$0xf] %v654
        %s657 = scalar_lea.vmem [#allocation5], 48
        %v658 = vld [vmem:[%s657] sm:$0xf]
        %v659 = vld [vmem:[%s657 + $0x4] sm:$0xf]
        %v660 = vld [vmem:[%s657 + $0x8] sm:$0xf]
        %v661 = vld [vmem:[%s657 + $0xc] sm:$0xf]
        %s662 = scalar_lea.vmem [#allocation7], 3
        %v663 = vld [vmem:[%s662] sm:$0x1]
        %v665 = vperm.slane %v663, 0
        %v671 = vunpack.c.l.b16 %v658
        %v672 = vunpack.c.l.b16 %v659
        %v673 = vunpack.c.l.b16 %v660
        %v674 = vunpack.c.l.b16 %v661
        %v675 = vpack.c.b16 %v672, %v671
        %v676 = vpack.c.b16 %v674, %v673
        %679 = vmatpush.bf16.msra.mxu0 0
        %680 = vmatpush.bf16.msra.mxu0 0
        %681 = vmatpush.bf16.msra.mxu0 0
        %682 = vmatpush.bf16.msra.mxu0 0
        %683 = vmatpush.bf16.msra.mxu0 0
        %684 = vmatpush.bf16.msra.mxu0 0
        %685 = vmatpush.bf16.msra.mxu0 %v676
        %686 = vmatpush.bf16.msra.mxu0 %v675
        %687 = vmatmul.bf16.gmra.mxu0 %v332
        %v688 = vpop.f32.mrf.mxu0
        %v689 = vadd.f32 %v665, %v688
        %v690 = vpop.f32.mrf.mxu0
        %v691 = vadd.f32 %v665, %v690
        %692 = vdwg.mxu0
        %v693 = vmul.f32 %v689, 0.70710677
        %v694 = vmul.f32 %v691, 0.70710677
        %v695 = vand.u32 2147483647, %v693
        %v696 = vand.u32 2147483647, %v694
        %v697 = vmul.f32 %v695, 0.3275911
        %v698 = vmul.f32 %v696, 0.3275911
        %v699 = vadd.f32 %v697, 1.0
        %v700 = vadd.f32 %v698, 1.0
        %v701 = vrcp.pop %v699
        %v702 = vrcp.pop %v700
        %v703 = vmul.f32 %v701, 1.0614054
        %v704 = vmul.f32 %v702, 1.0614054
        %v705 = vadd.f32 %v703, -1.4531521
        %v706 = vadd.f32 %v704, -1.4531521
        %v707 = vmul.f32 %v705, %v701
        %v708 = vmul.f32 %v706, %v702
        %v709 = vadd.f32 %v707, 1.4214138
        %v710 = vadd.f32 %v708, 1.4214138
        %v711 = vmul.f32 %v709, %v701
        %v712 = vmul.f32 %v710, %v702
        %v713 = vadd.f32 %v711, -0.28449672
        %v714 = vadd.f32 %v712, -0.28449672
        %v715 = vmul.f32 %v713, %v701
        %v716 = vmul.f32 %v714, %v702
        %v717 = vadd.f32 %v715, 0.2548296
        %v718 = vadd.f32 %v716, 0.2548296
        %v719 = vmul.f32 %v717, %v701
        %v720 = vmul.f32 %v718, %v702
        %v721 = vsub.f32 0.0, %v695
        %v722 = vsub.f32 0.0, %v696
        %v723 = vmul.f32 %v721, %v695
        %v724 = vmul.f32 %v722, %v696
        %v725 = vmul.f32 %v723, 1.442695
        %v726 = vpow.pop %v725
        %v727 = vmul.f32 %v724, 1.442695
        %v728 = vpow.pop %v727
        %v729 = vmul.f32 %v719, %v726
        %v730 = vmul.f32 %v720, %v728
        %v731 = vsub.f32 1.0, %v729
        %v732 = vsub.f32 1.0, %v730
        %vm733 = vcmp.ge.f32.partialorder %v693, 0.0
        %vm734 = vcmp.ge.f32.partialorder %v694, 0.0
        %v735 = vsub.f32 0.0, %v731
        %v736 = vsub.f32 0.0, %v732
        %v737 = vsel %vm733, %v731, %v735
        %v738 = vsel %vm734, %v732, %v736
        %v739 = vmul.f32 %v689, 0.5
        %v740 = vmul.f32 %v691, 0.5
        %v741 = vadd.f32 %v737, 1.0
        %v742 = vadd.f32 %v738, 1.0
        %v743 = vmul.f32 %v739, %v741
        %v744 = vmul.f32 %v740, %v742
        %v745 = vpack.c.bf16 %v744, %v743
        %v747 = vsel %vm330, %v745, 0
        %749 = vmatpush.bf16.msra.mxu0 0
        %750 = vmatpush.bf16.msra.mxu0 0
        %751 = vmatpush.bf16.msra.mxu0 0
        %752 = vmatpush.bf16.msra.mxu0 0
        %753 = vmatpush.bf16.msra.mxu0 0
        %754 = vmatpush.bf16.msra.mxu0 0
        %755 = vmatpush.bf16.msra.mxu0 %v413
        %756 = vmatpush.bf16.msra.mxu0 %v412
        %757 = vmatmul.bf16.gmra.mxu0 %v747
        %v758 = vpop.f32.mrf.mxu0
        %v759 = vadd.f32 %v402, %v758
        %v760 = vpop.f32.mrf.mxu0
        %v761 = vadd.f32 %v402, %v760
        %762 = vdwg.mxu0
        %v763 = vpack.c.bf16 %v759, %v759
        %v764 = vpack.c.bf16 %v761, %v761
        %765 = vst [vmem:[%s294 + $0xc] sm:$0xf] %v763
        %766 = vst [vmem:[%s294 + $0x1c] sm:$0xf] %v764
        %s767 = sand.u32 %s142, 1
        %s768 = scalar_lea.sflag [#allocation4], %s767
        %s769 = sand.u32 %s142, 1
        %s770 = smul.addr %s769, 32
        %s771 = scalar_lea.vmem [#allocation10], %s770
        // Predicated region
        $region57: #{tpu_custom_call.1} parent=39 // pred_check
          %p772 = pneg %p152
        $region58: #{tpu_custom_call.1} parent=39 // pred_check_branch
          %774 = sbr.rel (%p772) target = $region60
        $region59: #{tpu_custom_call.1} parent=39 // pred_region
          %s775 = smul.u32 2, %s24
          %777 = vsyncadd %s768, 0
          %s778 = smul.addr %s775, 4
          %s779 = smul.addr %s778, 4
          %s780 = scalar_lea.hbm %s5, %s779
          %s781 = sshll.u32 %s771, 4
          %s782 = int_to_ptr.vmem [resolvable:$true] %s781
          %s783 = sshll.u32 %s780, 4
          %s784 = int_to_ptr.hbm [resolvable:$true] %s783
          %789 = dma.vmem_to_hbm [thread:$0]  %s782, 512, %s784, %s768, 256, 256, 16
        $region60: #{tpu_custom_call.1} parent=39 // pred_fallthru
          _
      $region40: #{tpu_custom_call.1} parent=5 // pred_fallthru
        _
      %p790 = scmp.le.s32.totalorder 2, %s19
      // Predicated region
      $region61: #{tpu_custom_call.1} parent=5 // pred_check
        %p791 = pneg %p790
      $region62: #{tpu_custom_call.1} parent=5 // pred_check_branch
        %793 = sbr.rel (%p791) target = $region64
      $region63: #{tpu_custom_call.1} parent=5 // pred_region
        %s794 = ssub.s32 %s19, 2
        // Predicated region
        $region65: #{tpu_custom_call.1} parent=63 // pred_check
          %p795 = pneg %p158
        $region66: #{tpu_custom_call.1} parent=63 // pred_check_branch
          %797 = sbr.rel (%p795) target = $region68
        $region67: #{tpu_custom_call.1} parent=63 // pred_region
          %s798 = sand.u32 %s143, 1
          %s799 = scalar_lea.sflag [#allocation4], %s798
          %s800 = sand.u32 %s143, 1
          %s801 = smul.addr %s800, 32
          %s802 = scalar_lea.vmem [#allocation10], %s801
          %804 = dma.done %s799, 512
        $region68: #{tpu_custom_call.1} parent=63 // pred_fallthru
          _
      $region64: #{tpu_custom_call.1} parent=5 // pred_fallthru
        _
    $region6: #{tpu_custom_call.1} parent=1 // loop_footer
      %s23 = sadd.s32 1, %s19
    $region7: #{tpu_custom_call.1} parent=1 // loop_footer_branch
      %18 = sbr.rel target = $region3
    $region8: #{tpu_custom_call.1} parent=1 // loop_exit
      _
    %805 = vsyncpa [#allocation3], 1
    %s806 = scalar_lea.sflag [#allocation3], 1
    %807 = vsyncpa %s806, 1
    %808 = vsyncpa [#allocation6], 1
    %809 = vsyncpa [#allocation9], 1
    %810 = vsyncpa [#allocation4], 1
    %s811 = scalar_lea.sflag [#allocation4], 1
    %812 = vsyncpa %s811, 1

</llo_original>
